<compile_context>
chip_gen: v6e
topology: v6e:2x2x1
jax: 0.10.0
libtpu: 0.0.40
codegen_flags: <defaults>
</compile_context>

<pallas_src>
import functools

import jax
import jax.numpy as jnp
from jax.experimental import pallas as pl
from jax.experimental.pallas import tpu as pltpu


def _inr_fused_kernel(x_ref, *refs, scale, n_layers):
    """Fused Gauss-INR MLP on one N-tile.

    Layout: activations are (features, tile_n); N is the lane (fast) axis.
      x_ref : (Din0, tile_n) f32
      refs  : w0, b0, w1, b1, ..., w_{L-1}, b_{L-1}, o_ref
              w_i : (Dout_i, Din_i) torch nn.Linear layout; f32 if Din_i<=4 else bf16
              b_i : (Dout_i, 1) f32
      o_ref : (Dout_last, tile_n) f32
    """
    o_ref = refs[-1]
    wb_refs = refs[:-1]
    neg_scale_sq = -(scale * scale)  # fold scale into the exponent (one fewer VPU mul)

    x = x_ref[...]  # (Din0, tile_n) f32
    for li in range(n_layers):
        w = wb_refs[2 * li][...]        # (Dout, Din)
        b = wb_refs[2 * li + 1][...]    # (Dout, 1) f32
        dout, din = w.shape
        if din <= 4:
            # Tiny contraction dim (2-D coords): f32 broadcast multiply-adds on the VPU
            # instead of wasting an MXU pass on a K=2 matmul.
            y = b  # (Dout, 1) -> broadcasts to (Dout, tile_n) on first add
            for d in range(din):
                y = y + w[:, d:d + 1] * x[d:d + 1, :]
        else:
            # bf16 x bf16 -> f32 accumulate on the MXU (weights pre-cast in the wrapper).
            y = jnp.dot(w, x.astype(jnp.bfloat16),
                        preferred_element_type=jnp.float32) + b
        if li != n_layers - 1:
            # GaussLayer nonlinearity: exp(-(scale*y)^2) == exp(neg_scale_sq * y * y), f32.
            y = jnp.exp(neg_scale_sq * (y * y))
        x = y
    o_ref[...] = x.astype(o_ref.dtype)


def _choose_tile_n(n, requested):
    """Clamp tile_n so the grid keeps >= 2 steps (both v7x TCs get work) while staying
    lane-aligned (multiple of 512 >= 512)."""
    half = -(-n // 2)                 # ceil(n / 2)
    half = -(-half // 512) * 512      # round up to a multiple of 512
    return int(max(512, min(requested, half)))


def inr_forward(coords, params, *, scale=10.0, tile_n=8192):
    """coords: (N, in_features) f32.
    params: list of (w, b) with torch nn.Linear layout: w (Dout, Din), b (Dout,).
    Returns (N, out_features) f32, matching INR.forward(coords)."""
    N, in_features = coords.shape
    out_features = params[-1][0].shape[0]
    n_layers = len(params)

    tile_n = _choose_tile_n(N, tile_n)
    # Pad N up to a multiple of tile_n (ragged point counts). Padded zero coords flow
    # through the net harmlessly and are sliced off at the end.
    n_pad = pl.cdiv(N, tile_n) * tile_n
    x_t = jnp.zeros((in_features, n_pad), jnp.float32).at[:, :N].set(
        coords.T.astype(jnp.float32))

    wb_inputs = []
    wb_specs = []
    for w, b in params:
        dout, din = w.shape
        # MXU layers get bf16 weights (cast once here); the tiny first layer stays f32.
        w_dtype = jnp.float32 if din <= 4 else jnp.bfloat16
        wb_inputs.append(w.astype(w_dtype))
        wb_specs.append(pl.BlockSpec((dout, din), lambda i: (0, 0)))   # full weight block
        wb_inputs.append(b.reshape(dout, 1).astype(jnp.float32))
        wb_specs.append(pl.BlockSpec((dout, 1), lambda i: (0, 0)))     # bias column

    kernel = functools.partial(_inr_fused_kernel, scale=float(scale), n_layers=n_layers)

    out_t = pl.pallas_call(
        kernel,
        out_shape=jax.ShapeDtypeStruct((out_features, n_pad), jnp.float32),
        grid_spec=pl.GridSpec(
            grid=(n_pad // tile_n,),
            in_specs=[pl.BlockSpec((in_features, tile_n), lambda i: (0, i))] + wb_specs,
            out_specs=pl.BlockSpec((out_features, tile_n), lambda i: (0, i)),
        ),
        compiler_params=pltpu.CompilerParams(dimension_semantics=("parallel",)),
    )(x_t, *wb_inputs)

    return out_t[:, :N].T


def init_inr_params(key, in_features, hidden_features, hidden_layers, out_features):
    """PyTorch nn.Linear default init: U(-1/sqrt(fan_in), 1/sqrt(fan_in)).
    Weights stored in torch layout (fan_out, fan_in)."""
    dims = [in_features] + [hidden_features] * (hidden_layers + 1) + [out_features]
    params = []
    for fan_in, fan_out in zip(dims[:-1], dims[1:]):
        key, kw, kb = jax.random.split(key, 3)
        bound = 1.0 / jnp.sqrt(float(fan_in))
        w = jax.random.uniform(kw, (fan_out, fan_in), jnp.float32, -bound, bound)
        b = jax.random.uniform(kb, (fan_out,), jnp.float32, -bound, bound)
        params.append((w, b))
    return params


def inr_reference(coords, params, *, scale=10.0, match_kernel_precision=False):
    """Pure-JAX reference following the PyTorch module exactly.
    With match_kernel_precision=True, applies the same bf16-operand dots (f32 accumulate)
    that the Pallas kernel uses, so the comparison tolerance can stay tight."""
    x = coords.astype(jnp.float32)
    n_layers = len(params)
    for li, (w, b) in enumerate(params):
        if match_kernel_precision and w.shape[1] > 4:
            y = jnp.dot(x.astype(jnp.bfloat16), w.T.astype(jnp.bfloat16),
                        preferred_element_type=jnp.float32) + b
        else:
            y = x @ w.T + b
        if li != n_layers - 1:
            y = jnp.exp(-((scale * y) ** 2))
        x = y
    return x


if __name__ == "__main__":
    # Module-consistent small shapes: 2-D coords, hidden=32, 2 hidden layers, 3 outputs.
    in_features = 2
    hidden_features = 32
    hidden_layers = 2
    out_features = 3
    scale = 10.0
    N = 2000  # deliberately NOT a multiple of tile_n to exercise the ragged-N path

    key = jax.random.PRNGKey(0)
    key, kc = jax.random.split(key)
    coords = jax.random.uniform(kc, (N, in_features), jnp.float32, -1.0, 1.0)

    params = init_inr_params(key, in_features, hidden_features, hidden_layers, out_features)

    out = inr_forward(coords, params, scale=scale)
    out = jax.block_until_ready(out)

    ref_matched = inr_reference(coords, params, scale=scale, match_kernel_precision=True)
    ref_f32 = inr_reference(coords, params, scale=scale, match_kernel_precision=False)

    assert out.shape == (N, out_features)
    assert bool(jnp.all(jnp.isfinite(out))), "non-finite values in Pallas output"
    # Tight check vs a reference using the kernel's exact precision recipe.
    assert jnp.allclose(out, ref_matched, atol=5e-3, rtol=5e-3), \
        "Pallas output mismatch vs precision-matched JAX reference"
    # Loose semantic check vs the pure-f32 PyTorch-equivalent reference (bf16 MXU operands
    # plus the sharp scale=10 Gaussian make a few-1e-2 absolute deviation expected).
    assert jnp.allclose(out, ref_f32, atol=8e-2, rtol=8e-2), \
        "Pallas output mismatch vs f32 JAX reference"

    # TODO(synk): pos_encode=True / complex=True branches of INR are unused defaults and not implemented.
    print("KERNEL_OK")
</pallas_src>

<mosaic_0001>
module attributes {stable_mosaic.version = 11 : i64} {
  func.func @_inr_fused_kernel(%arg0: i32, %arg1: memref<2x1024xf32, #tpu.memory_space<vmem>>, %arg2: memref<32x2xf32, #tpu.memory_space<vmem>>, %arg3: memref<32x1xf32, #tpu.memory_space<vmem>>, %arg4: memref<32x32xbf16, #tpu.memory_space<vmem>>, %arg5: memref<32x1xf32, #tpu.memory_space<vmem>>, %arg6: memref<32x32xbf16, #tpu.memory_space<vmem>>, %arg7: memref<32x1xf32, #tpu.memory_space<vmem>>, %arg8: memref<3x32xbf16, #tpu.memory_space<vmem>>, %arg9: memref<3x1xf32, #tpu.memory_space<vmem>>, %arg10: memref<3x1024xf32, #tpu.memory_space<vmem>>) attributes {dimension_semantics = [#tpu.dimension_semantics<parallel>], iteration_bounds = array<i64: 2>, scalar_prefetch = 0 : i64, scratch_operands = 0 : i64, tpu.core_type = #tpu.core_type<tc>, window_params = [{transform_indices = @transform_0, window_bounds = array<i64: 2, 1024>}, {pipeline_mode = #tpu.pipeline_mode<synchronous>, transform_indices = @transform_1, window_bounds = array<i64: 32, 2>}, {pipeline_mode = #tpu.pipeline_mode<synchronous>, transform_indices = @transform_2, window_bounds = array<i64: 32, 1>}, {pipeline_mode = #tpu.pipeline_mode<synchronous>, transform_indices = @transform_3, window_bounds = array<i64: 32, 32>}, {pipeline_mode = #tpu.pipeline_mode<synchronous>, transform_indices = @transform_4, window_bounds = array<i64: 32, 1>}, {pipeline_mode = #tpu.pipeline_mode<synchronous>, transform_indices = @transform_5, window_bounds = array<i64: 32, 32>}, {pipeline_mode = #tpu.pipeline_mode<synchronous>, transform_indices = @transform_6, window_bounds = array<i64: 32, 1>}, {pipeline_mode = #tpu.pipeline_mode<synchronous>, transform_indices = @transform_7, window_bounds = array<i64: 3, 32>}, {pipeline_mode = #tpu.pipeline_mode<synchronous>, transform_indices = @transform_8, window_bounds = array<i64: 3, 1>}, {transform_indices = @transform_9, window_bounds = array<i64: 3, 1024>}]} {
    %c0 = arith.constant 0 : index
    %c0_0 = arith.constant 0 : index
    %0 = vector.load %arg1[%c0, %c0_0] : memref<2x1024xf32, #tpu.memory_space<vmem>>, vector<2x1024xf32>
    %c0_1 = arith.constant 0 : index
    %c0_2 = arith.constant 0 : index
    %1 = vector.load %arg2[%c0_1, %c0_2] : memref<32x2xf32, #tpu.memory_space<vmem>>, vector<32x2xf32>
    %c0_3 = arith.constant 0 : index
    %c0_4 = arith.constant 0 : index
    %2 = vector.load %arg3[%c0_3, %c0_4] : memref<32x1xf32, #tpu.memory_space<vmem>>, vector<32x1xf32>
    %3 = vector.extract_strided_slice %1 {offsets = [0, 0], sizes = [32, 1], strides = [1, 1]} : vector<32x2xf32> to vector<32x1xf32>
    %4 = vector.extract_strided_slice %0 {offsets = [0, 0], sizes = [1, 1024], strides = [1, 1]} : vector<2x1024xf32> to vector<1x1024xf32>
    %5 = vector.broadcast %3 : vector<32x1xf32> to vector<32x1024xf32>
    %6 = vector.broadcast %4 : vector<1x1024xf32> to vector<32x1024xf32>
    %7 = arith.mulf %5, %6 : vector<32x1024xf32>
    %8 = vector.broadcast %2 : vector<32x1xf32> to vector<32x1024xf32>
    %9 = arith.addf %8, %7 : vector<32x1024xf32>
    %10 = vector.extract_strided_slice %1 {offsets = [0, 1], sizes = [32, 1], strides = [1, 1]} : vector<32x2xf32> to vector<32x1xf32>
    %11 = vector.extract_strided_slice %0 {offsets = [1, 0], sizes = [1, 1024], strides = [1, 1]} : vector<2x1024xf32> to vector<1x1024xf32>
    %12 = vector.broadcast %10 : vector<32x1xf32> to vector<32x1024xf32>
    %13 = vector.broadcast %11 : vector<1x1024xf32> to vector<32x1024xf32>
    %14 = arith.mulf %12, %13 : vector<32x1024xf32>
    %15 = arith.addf %9, %14 : vector<32x1024xf32>
    %16 = arith.mulf %15, %15 : vector<32x1024xf32>
    %cst = arith.constant -1.000000e+02 : f32
    %17 = vector.broadcast %cst : f32 to vector<32x1024xf32>
    %18 = arith.mulf %17, %16 : vector<32x1024xf32>
    %19 = math.exp %18 : vector<32x1024xf32>
    %c0_5 = arith.constant 0 : index
    %c0_6 = arith.constant 0 : index
    %20 = vector.load %arg4[%c0_5, %c0_6] : memref<32x32xbf16, #tpu.memory_space<vmem>>, vector<32x32xbf16>
    %c0_7 = arith.constant 0 : index
    %c0_8 = arith.constant 0 : index
    %21 = vector.load %arg5[%c0_7, %c0_8] : memref<32x1xf32, #tpu.memory_space<vmem>>, vector<32x1xf32>
    %22 = arith.truncf %19 : vector<32x1024xf32> to vector<32x1024xbf16>
    %cst_9 = arith.constant dense<0.000000e+00> : vector<32x1024xf32>
    %23 = tpu.matmul %20, %22, %cst_9 {dimension_numbers = #tpu.dot_dimension_numbers<[1], [0], [0], [1], [0, 0, 1, 1], [], []>} : vector<32x32xbf16>, vector<32x1024xbf16>, vector<32x1024xf32> -> vector<32x1024xf32>
    %24 = vector.broadcast %21 : vector<32x1xf32> to vector<32x1024xf32>
    %25 = arith.addf %23, %24 : vector<32x1024xf32>
    %26 = arith.mulf %25, %25 : vector<32x1024xf32>
    %cst_10 = arith.constant -1.000000e+02 : f32
    %27 = vector.broadcast %cst_10 : f32 to vector<32x1024xf32>
    %28 = arith.mulf %27, %26 : vector<32x1024xf32>
    %29 = math.exp %28 : vector<32x1024xf32>
    %c0_11 = arith.constant 0 : index
    %c0_12 = arith.constant 0 : index
    %30 = vector.load %arg6[%c0_11, %c0_12] : memref<32x32xbf16, #tpu.memory_space<vmem>>, vector<32x32xbf16>
    %c0_13 = arith.constant 0 : index
    %c0_14 = arith.constant 0 : index
    %31 = vector.load %arg7[%c0_13, %c0_14] : memref<32x1xf32, #tpu.memory_space<vmem>>, vector<32x1xf32>
    %32 = arith.truncf %29 : vector<32x1024xf32> to vector<32x1024xbf16>
    %cst_15 = arith.constant dense<0.000000e+00> : vector<32x1024xf32>
    %33 = tpu.matmul %30, %32, %cst_15 {dimension_numbers = #tpu.dot_dimension_numbers<[1], [0], [0], [1], [0, 0, 1, 1], [], []>} : vector<32x32xbf16>, vector<32x1024xbf16>, vector<32x1024xf32> -> vector<32x1024xf32>
    %34 = vector.broadcast %31 : vector<32x1xf32> to vector<32x1024xf32>
    %35 = arith.addf %33, %34 : vector<32x1024xf32>
    %36 = arith.mulf %35, %35 : vector<32x1024xf32>
    %cst_16 = arith.constant -1.000000e+02 : f32
    %37 = vector.broadcast %cst_16 : f32 to vector<32x1024xf32>
    %38 = arith.mulf %37, %36 : vector<32x1024xf32>
    %39 = math.exp %38 : vector<32x1024xf32>
    %c0_17 = arith.constant 0 : index
    %c0_18 = arith.constant 0 : index
    %40 = vector.load %arg8[%c0_17, %c0_18] : memref<3x32xbf16, #tpu.memory_space<vmem>>, vector<3x32xbf16>
    %c0_19 = arith.constant 0 : index
    %c0_20 = arith.constant 0 : index
    %41 = vector.load %arg9[%c0_19, %c0_20] : memref<3x1xf32, #tpu.memory_space<vmem>>, vector<3x1xf32>
    %42 = arith.truncf %39 : vector<32x1024xf32> to vector<32x1024xbf16>
    %cst_21 = arith.constant dense<0.000000e+00> : vector<3x1024xf32>
    %43 = tpu.matmul %40, %42, %cst_21 {dimension_numbers = #tpu.dot_dimension_numbers<[1], [0], [0], [1], [0, 0, 1, 1], [], []>} : vector<3x32xbf16>, vector<32x1024xbf16>, vector<3x1024xf32> -> vector<3x1024xf32>
    %44 = vector.broadcast %41 : vector<3x1xf32> to vector<3x1024xf32>
    %45 = arith.addf %43, %44 : vector<3x1024xf32>
    %c0_22 = arith.constant 0 : index
    %c0_23 = arith.constant 0 : index
    %46 = vector.load %arg10[%c0_22, %c0_23] : memref<3x1024xf32, #tpu.memory_space<vmem>>, vector<3x1024xf32>
    tpu.vector_store %arg10[%c0_22, %c0_23], %45 {strides = array<i32>} : memref<3x1024xf32, #tpu.memory_space<vmem>>, vector<3x1024xf32>,
    return
  }
  func.func @transform_0(%arg0: i32) -> (i32, i32) {
    %c0_i32 = arith.constant 0 : i32
    %c0_i32_0 = arith.constant 0 : i32
    return %c0_i32, %arg0 : i32, i32
  }
  func.func @transform_1(%arg0: i32) -> (i32, i32) {
    %c0_i32 = arith.constant 0 : i32
    %c0_i32_0 = arith.constant 0 : i32
    %c0_i32_1 = arith.constant 0 : i32
    return %c0_i32, %c0_i32_0 : i32, i32
  }
  func.func @transform_2(%arg0: i32) -> (i32, i32) {
    %c0_i32 = arith.constant 0 : i32
    %c0_i32_0 = arith.constant 0 : i32
    %c0_i32_1 = arith.constant 0 : i32
    return %c0_i32, %c0_i32_0 : i32, i32
  }
  func.func @transform_3(%arg0: i32) -> (i32, i32) {
    %c0_i32 = arith.constant 0 : i32
    %c0_i32_0 = arith.constant 0 : i32
    %c0_i32_1 = arith.constant 0 : i32
    return %c0_i32, %c0_i32_0 : i32, i32
  }
  func.func @transform_4(%arg0: i32) -> (i32, i32) {
    %c0_i32 = arith.constant 0 : i32
    %c0_i32_0 = arith.constant 0 : i32
    %c0_i32_1 = arith.constant 0 : i32
    return %c0_i32, %c0_i32_0 : i32, i32
  }
  func.func @transform_5(%arg0: i32) -> (i32, i32) {
    %c0_i32 = arith.constant 0 : i32
    %c0_i32_0 = arith.constant 0 : i32
    %c0_i32_1 = arith.constant 0 : i32
    return %c0_i32, %c0_i32_0 : i32, i32
  }
  func.func @transform_6(%arg0: i32) -> (i32, i32) {
    %c0_i32 = arith.constant 0 : i32
    %c0_i32_0 = arith.constant 0 : i32
    %c0_i32_1 = arith.constant 0 : i32
    return %c0_i32, %c0_i32_0 : i32, i32
  }
  func.func @transform_7(%arg0: i32) -> (i32, i32) {
    %c0_i32 = arith.constant 0 : i32
    %c0_i32_0 = arith.constant 0 : i32
    %c0_i32_1 = arith.constant 0 : i32
    return %c0_i32, %c0_i32_0 : i32, i32
  }
  func.func @transform_8(%arg0: i32) -> (i32, i32) {
    %c0_i32 = arith.constant 0 : i32
    %c0_i32_0 = arith.constant 0 : i32
    %c0_i32_1 = arith.constant 0 : i32
    return %c0_i32, %c0_i32_0 : i32, i32
  }
  func.func @transform_9(%arg0: i32) -> (i32, i32) {
    %c0_i32 = arith.constant 0 : i32
    %c0_i32_0 = arith.constant 0 : i32
    return %c0_i32, %arg0 : i32, i32
  }
}

</mosaic_0001>

<llo_original>
// kernel: tpu_custom_call.1
$region0: #{tpu_custom_call.1}
  #allocation0 [shape = 'u32[]', space=smem, size = 0x4, offset = 0x4, fixed_abs, tag = 'smem constant byte address 0x4 - core index']
  #allocation1 [shape = 'u32[144,128]{1,0:T(1,128)}', space=vmem, size = 0x12000, scoped, tag = 'internal scratch']
  %s0 = inlined_call_operand.vmem [shape: f32[2,2048], index: 0, kind: input, shape index: {}]
  %s1 = inlined_call_operand.vmem [shape: f32[32,2], index: 1, kind: input, shape index: {}]
  %s2 = inlined_call_operand.vmem [shape: f32[32,1], index: 2, kind: input, shape index: {}]
  %s3 = inlined_call_operand.vmem [shape: bf16[32,32], index: 3, kind: input, shape index: {}]
  %s4 = inlined_call_operand.vmem [shape: f32[32,1], index: 4, kind: input, shape index: {}]
  %s5 = inlined_call_operand.vmem [shape: bf16[32,32], index: 5, kind: input, shape index: {}]
  %s6 = inlined_call_operand.vmem [shape: f32[32,1], index: 6, kind: input, shape index: {}]
  %s7 = inlined_call_operand.vmem [shape: bf16[3,32], index: 7, kind: input, shape index: {}]
  %s8 = inlined_call_operand.vmem [shape: f32[3,1], index: 8, kind: input, shape index: {}]
  %s9 = inlined_call_operand.hbm [shape: f32[3,2048], index: 9, kind: output, shape index: {}]
  %s10 = sld [smem:[#allocation0]]
  $region69: #{tpu_custom_call.1} parent=0
    _
  %s12 = ssub.s32 1, %s10
  %s13 = scalar_select 0, %s12, %s10
  $region1: #{tpu_custom_call.1} parent=0
    #allocation2 [shape = 'u8[32768]{0}', space=vmem, size = 0x8000, scoped, tag = 'output window, operand 0']
    #allocation3 [shape = 's32[2]{0}', space=sflag, size = 0x8, scoped, tag = 'scoped memory for tpu_custom_call.1']
    %14 = vsyncpa [#allocation3], 0
    %s15 = scalar_lea.sflag [#allocation3], 1
    %16 = vsyncpa %s15, 0
    loop: start=0, step=1, limit=4
    $region2: #{tpu_custom_call.1} parent=1 // loop_pre_header
      _
    $region3: #{tpu_custom_call.1} parent=1 // loop_header
      %s18 = sphi 0, %s22
      %p19 = scmp.ge.s32.totalorder %s18, 4
      %s28 = sphi 0, %s30
      %s31 = sphi 0, %s28
      %s32 = sphi 0, %s31
      %s48 = sphi 0, %s32
      %s52 = sphi 0, %s52
      %s54 = sphi 0, %s52
      %s55 = sphi 0, %s54
      %s69 = sphi 0, %s55
      %s73 = sphi 0, %s73
      %s75 = sphi 0, %s73
      %s76 = sphi 0, %s75
      %s90 = sphi 0, %s76
      %s94 = sphi 0, %s94
      %s96 = sphi 0, %s94
      %s97 = sphi 0, %s96
      %s111 = sphi 0, %s97
      %s115 = sphi 0, %s115
      %s117 = sphi 0, %s115
      %s118 = sphi 0, %s117
      %s132 = sphi 0, %s118
      %s136 = sphi 0, %s136
      %s138 = sphi 0, %s136
      %s139 = sphi 0, %s138
      %s153 = sphi 0, %s139
      %s157 = sphi 0, %s157
      %s159 = sphi 0, %s157
      %s160 = sphi 0, %s159
      %s174 = sphi 0, %s160
      %s178 = sphi 0, %s178
      %s180 = sphi 0, %s178
      %s181 = sphi 0, %s180
      %s195 = sphi 0, %s181
      %s199 = sphi 0, %s199
      %s201 = sphi 0, %s199
      %s202 = sphi 0, %s201
      %s216 = sphi 0, %s202
      %s222 = sphi 0, %s224
      %s225 = sphi 0, %s222
      %s226 = sphi 0, %s225
      %s242 = sphi 0, %s226
    $region4: #{tpu_custom_call.1} parent=1 // loop_header_branch
      %21 = sbr.rel (%p19) target = $region8
    $region5: #{tpu_custom_call.1} parent=1 // loop_body
      %s23 = ssub.s32 %s18, 1
      %s24 = ssub.s32 %s18, 2
      %s25 = sadd.s32 %s18, 1
      %s26 = ssub.s32 %s18, %s25
      %p27 = scmp.eq.s32.totalorder %s26, 0
      %s29 = sadd.s32 %s28, 1
      %s30 = scalar_select %p27, %s28, %s29
      %p33 = pneg %p27
      %p34 = scmp.eq.s32.totalorder %s18, 1
      %p35 = por %p33, %p34
      %p36 = scmp.ne.s32.totalorder %s28, %s31
      %p37 = scmp.eq.s32.totalorder %s18, 0
      %p38 = por %p36, %p37
      %p39 = scmp.ne.s32.totalorder %s28, %s31
      %p40 = scmp.eq.s32.totalorder %s23, 1
      %p41 = por %p39, %p40
      %p42 = scmp.ne.s32.totalorder %s31, %s32
      %p43 = scmp.eq.s32.totalorder %s23, 0
      %p44 = por %p42, %p43
      %p45 = scmp.ne.s32.totalorder %s31, %s32
      %p46 = scmp.eq.s32.totalorder %s24, 1
      %p47 = por %p45, %p46
      %p49 = scmp.ne.s32.totalorder %s32, %s48
      %p50 = scmp.eq.s32.totalorder %s24, 0
      %p51 = por %p49, %p50
      %s53 = sadd.s32 %s52, 1
      %p56 = scmp.eq.s32.totalorder %s18, 1
      %p57 = scmp.ne.s32.totalorder %s52, %s54
      %p58 = scmp.eq.s32.totalorder %s18, 0
      %p59 = por %p57, %p58
      %p60 = scmp.ne.s32.totalorder %s52, %s54
      %p61 = scmp.eq.s32.totalorder %s23, 1
      %p62 = por %p60, %p61
      %p63 = scmp.ne.s32.totalorder %s54, %s55
      %p64 = scmp.eq.s32.totalorder %s23, 0
      %p65 = por %p63, %p64
      %p66 = scmp.ne.s32.totalorder %s54, %s55
      %p67 = scmp.eq.s32.totalorder %s24, 1
      %p68 = por %p66, %p67
      %p70 = scmp.ne.s32.totalorder %s55, %s69
      %p71 = scmp.eq.s32.totalorder %s24, 0
      %p72 = por %p70, %p71
      %s74 = sadd.s32 %s73, 1
      %p77 = scmp.eq.s32.totalorder %s18, 1
      %p78 = scmp.ne.s32.totalorder %s73, %s75
      %p79 = scmp.eq.s32.totalorder %s18, 0
      %p80 = por %p78, %p79
      %p81 = scmp.ne.s32.totalorder %s73, %s75
      %p82 = scmp.eq.s32.totalorder %s23, 1
      %p83 = por %p81, %p82
      %p84 = scmp.ne.s32.totalorder %s75, %s76
      %p85 = scmp.eq.s32.totalorder %s23, 0
      %p86 = por %p84, %p85
      %p87 = scmp.ne.s32.totalorder %s75, %s76
      %p88 = scmp.eq.s32.totalorder %s24, 1
      %p89 = por %p87, %p88
      %p91 = scmp.ne.s32.totalorder %s76, %s90
      %p92 = scmp.eq.s32.totalorder %s24, 0
      %p93 = por %p91, %p92
      %s95 = sadd.s32 %s94, 1
      %p98 = scmp.eq.s32.totalorder %s18, 1
      %p99 = scmp.ne.s32.totalorder %s94, %s96
      %p100 = scmp.eq.s32.totalorder %s18, 0
      %p101 = por %p99, %p100
      %p102 = scmp.ne.s32.totalorder %s94, %s96
      %p103 = scmp.eq.s32.totalorder %s23, 1
      %p104 = por %p102, %p103
      %p105 = scmp.ne.s32.totalorder %s96, %s97
      %p106 = scmp.eq.s32.totalorder %s23, 0
      %p107 = por %p105, %p106
      %p108 = scmp.ne.s32.totalorder %s96, %s97
      %p109 = scmp.eq.s32.totalorder %s24, 1
      %p110 = por %p108, %p109
      %p112 = scmp.ne.s32.totalorder %s97, %s111
      %p113 = scmp.eq.s32.totalorder %s24, 0
      %p114 = por %p112, %p113
      %s116 = sadd.s32 %s115, 1
      %p119 = scmp.eq.s32.totalorder %s18, 1
      %p120 = scmp.ne.s32.totalorder %s115, %s117
      %p121 = scmp.eq.s32.totalorder %s18, 0
      %p122 = por %p120, %p121
      %p123 = scmp.ne.s32.totalorder %s115, %s117
      %p124 = scmp.eq.s32.totalorder %s23, 1
      %p125 = por %p123, %p124
      %p126 = scmp.ne.s32.totalorder %s117, %s118
      %p127 = scmp.eq.s32.totalorder %s23, 0
      %p128 = por %p126, %p127
      %p129 = scmp.ne.s32.totalorder %s117, %s118
      %p130 = scmp.eq.s32.totalorder %s24, 1
      %p131 = por %p129, %p130
      %p133 = scmp.ne.s32.totalorder %s118, %s132
      %p134 = scmp.eq.s32.totalorder %s24, 0
      %p135 = por %p133, %p134
      %s137 = sadd.s32 %s136, 1
      %p140 = scmp.eq.s32.totalorder %s18, 1
      %p141 = scmp.ne.s32.totalorder %s136, %s138
      %p142 = scmp.eq.s32.totalorder %s18, 0
      %p143 = por %p141, %p142
      %p144 = scmp.ne.s32.totalorder %s136, %s138
      %p145 = scmp.eq.s32.totalorder %s23, 1
      %p146 = por %p144, %p145
      %p147 = scmp.ne.s32.totalorder %s138, %s139
      %p148 = scmp.eq.s32.totalorder %s23, 0
      %p149 = por %p147, %p148
      %p150 = scmp.ne.s32.totalorder %s138, %s139
      %p151 = scmp.eq.s32.totalorder %s24, 1
      %p152 = por %p150, %p151
      %p154 = scmp.ne.s32.totalorder %s139, %s153
      %p155 = scmp.eq.s32.totalorder %s24, 0
      %p156 = por %p154, %p155
      %s158 = sadd.s32 %s157, 1
      %p161 = scmp.eq.s32.totalorder %s18, 1
      %p162 = scmp.ne.s32.totalorder %s157, %s159
      %p163 = scmp.eq.s32.totalorder %s18, 0
      %p164 = por %p162, %p163
      %p165 = scmp.ne.s32.totalorder %s157, %s159
      %p166 = scmp.eq.s32.totalorder %s23, 1
      %p167 = por %p165, %p166
      %p168 = scmp.ne.s32.totalorder %s159, %s160
      %p169 = scmp.eq.s32.totalorder %s23, 0
      %p170 = por %p168, %p169
      %p171 = scmp.ne.s32.totalorder %s159, %s160
      %p172 = scmp.eq.s32.totalorder %s24, 1
      %p173 = por %p171, %p172
      %p175 = scmp.ne.s32.totalorder %s160, %s174
      %p176 = scmp.eq.s32.totalorder %s24, 0
      %p177 = por %p175, %p176
      %s179 = sadd.s32 %s178, 1
      %p182 = scmp.eq.s32.totalorder %s18, 1
      %p183 = scmp.ne.s32.totalorder %s178, %s180
      %p184 = scmp.eq.s32.totalorder %s18, 0
      %p185 = por %p183, %p184
      %p186 = scmp.ne.s32.totalorder %s178, %s180
      %p187 = scmp.eq.s32.totalorder %s23, 1
      %p188 = por %p186, %p187
      %p189 = scmp.ne.s32.totalorder %s180, %s181
      %p190 = scmp.eq.s32.totalorder %s23, 0
      %p191 = por %p189, %p190
      %p192 = scmp.ne.s32.totalorder %s180, %s181
      %p193 = scmp.eq.s32.totalorder %s24, 1
      %p194 = por %p192, %p193
      %p196 = scmp.ne.s32.totalorder %s181, %s195
      %p197 = scmp.eq.s32.totalorder %s24, 0
      %p198 = por %p196, %p197
      %s200 = sadd.s32 %s199, 1
      %p203 = scmp.eq.s32.totalorder %s18, 1
      %p204 = scmp.ne.s32.totalorder %s199, %s201
      %p205 = scmp.eq.s32.totalorder %s18, 0
      %p206 = por %p204, %p205
      %p207 = scmp.ne.s32.totalorder %s199, %s201
      %p208 = scmp.eq.s32.totalorder %s23, 1
      %p209 = por %p207, %p208
      %p210 = scmp.ne.s32.totalorder %s201, %s202
      %p211 = scmp.eq.s32.totalorder %s23, 0
      %p212 = por %p210, %p211
      %p213 = scmp.ne.s32.totalorder %s201, %s202
      %p214 = scmp.eq.s32.totalorder %s24, 1
      %p215 = por %p213, %p214
      %p217 = scmp.ne.s32.totalorder %s202, %s216
      %p218 = scmp.eq.s32.totalorder %s24, 0
      %p219 = por %p217, %p218
      %s220 = ssub.s32 %s18, %s25
      %p221 = scmp.eq.s32.totalorder %s220, 0
      %s223 = sadd.s32 %s222, 1
      %s224 = scalar_select %p221, %s222, %s223
      %p227 = pneg %p221
      %p228 = scmp.eq.s32.totalorder %s18, 1
      %p229 = por %p227, %p228
      %p230 = scmp.ne.s32.totalorder %s222, %s225
      %p231 = scmp.eq.s32.totalorder %s18, 0
      %p232 = por %p230, %p231
      %p233 = scmp.ne.s32.totalorder %s222, %s225
      %p234 = scmp.eq.s32.totalorder %s23, 1
      %p235 = por %p233, %p234
      %p236 = scmp.ne.s32.totalorder %s225, %s226
      %p237 = scmp.eq.s32.totalorder %s23, 0
      %p238 = por %p236, %p237
      %p239 = scmp.ne.s32.totalorder %s225, %s226
      %p240 = scmp.eq.s32.totalorder %s24, 1
      %p241 = por %p239, %p240
      %p243 = scmp.ne.s32.totalorder %s226, %s242
      %p244 = scmp.eq.s32.totalorder %s24, 0
      %p245 = por %p243, %p244
      %p246 = scmp.le.s32.totalorder 1, %s18
      %p247 = scmp.lt.s32.totalorder %s18, 3
      %p248 = pnand %p246, %p247
      %p249 = pneg %p248
      // Predicated region
      $region9: #{tpu_custom_call.1} parent=5 // pred_check
        _
      $region10: #{tpu_custom_call.1} parent=5 // pred_check_branch
        %251 = sbr.rel (%p248) target = $region12
      $region11: #{tpu_custom_call.1} parent=5 // pred_region
        %s252 = ssub.s32 %s18, 1
        // Predicated region
        $region13: #{tpu_custom_call.1} parent=11 // pred_check
          %p253 = pneg %p65
        $region14: #{tpu_custom_call.1} parent=11 // pred_check_branch
          %255 = sbr.rel (%p253) target = $region16
        $region15: #{tpu_custom_call.1} parent=11 // pred_region
          _
        $region16: #{tpu_custom_call.1} parent=11 // pred_fallthru
          _
        // Predicated region
        $region17: #{tpu_custom_call.1} parent=11 // pred_check
          %p256 = pneg %p86
        $region18: #{tpu_custom_call.1} parent=11 // pred_check_branch
          %258 = sbr.rel (%p256) target = $region20
        $region19: #{tpu_custom_call.1} parent=11 // pred_region
          _
        $region20: #{tpu_custom_call.1} parent=11 // pred_fallthru
          _
        // Predicated region
        $region21: #{tpu_custom_call.1} parent=11 // pred_check
          %p259 = pneg %p107
        $region22: #{tpu_custom_call.1} parent=11 // pred_check_branch
          %261 = sbr.rel (%p259) target = $region24
        $region23: #{tpu_custom_call.1} parent=11 // pred_region
          _
        $region24: #{tpu_custom_call.1} parent=11 // pred_fallthru
          _
        // Predicated region
        $region25: #{tpu_custom_call.1} parent=11 // pred_check
          %p262 = pneg %p128
        $region26: #{tpu_custom_call.1} parent=11 // pred_check_branch
          %264 = sbr.rel (%p262) target = $region28
        $region27: #{tpu_custom_call.1} parent=11 // pred_region
          _
        $region28: #{tpu_custom_call.1} parent=11 // pred_fallthru
          _
        // Predicated region
        $region29: #{tpu_custom_call.1} parent=11 // pred_check
          %p265 = pneg %p149
        $region30: #{tpu_custom_call.1} parent=11 // pred_check_branch
          %267 = sbr.rel (%p265) target = $region32
        $region31: #{tpu_custom_call.1} parent=11 // pred_region
          _
        $region32: #{tpu_custom_call.1} parent=11 // pred_fallthru
          _
        // Predicated region
        $region33: #{tpu_custom_call.1} parent=11 // pred_check
          %p268 = pneg %p170
        $region34: #{tpu_custom_call.1} parent=11 // pred_check_branch
          %270 = sbr.rel (%p268) target = $region36
        $region35: #{tpu_custom_call.1} parent=11 // pred_region
          _
        $region36: #{tpu_custom_call.1} parent=11 // pred_fallthru
          _
        // Predicated region
        $region37: #{tpu_custom_call.1} parent=11 // pred_check
          %p271 = pneg %p191
        $region38: #{tpu_custom_call.1} parent=11 // pred_check_branch
          %273 = sbr.rel (%p271) target = $region40
        $region39: #{tpu_custom_call.1} parent=11 // pred_region
          _
        $region40: #{tpu_custom_call.1} parent=11 // pred_fallthru
          _
        // Predicated region
        $region41: #{tpu_custom_call.1} parent=11 // pred_check
          %p274 = pneg %p212
        $region42: #{tpu_custom_call.1} parent=11 // pred_check_branch
          %276 = sbr.rel (%p274) target = $region44
        $region43: #{tpu_custom_call.1} parent=11 // pred_region
          _
        $region44: #{tpu_custom_call.1} parent=11 // pred_fallthru
          _
      $region12: #{tpu_custom_call.1} parent=5 // pred_fallthru
        _
      %p277 = scmp.lt.s32.totalorder %s18, 2
      // Predicated region
      $region45: #{tpu_custom_call.1} parent=5 // pred_check
        %p278 = pneg %p277
      $region46: #{tpu_custom_call.1} parent=5 // pred_check_branch
        %280 = sbr.rel (%p278) target = $region48
      $region47: #{tpu_custom_call.1} parent=5 // pred_region
        // Predicated region
        $region49: #{tpu_custom_call.1} parent=47 // pred_check
          %p281 = pneg %p38
        $region50: #{tpu_custom_call.1} parent=47 // pred_check_branch
          %283 = sbr.rel (%p281) target = $region52
        $region51: #{tpu_custom_call.1} parent=47 // pred_region
          %s284 = smul.u32 8, %s18
          %p285 = scmp.lt.s32.totalorder %s284, 15
          %s286 = scalar_select %p285, %s284, 15
          %s287 = smul.addr %s286, 2
          %s288 = scalar_lea.vmem %s0, %s287
          %s289 = smul.u32 8, %s18
        $region52: #{tpu_custom_call.1} parent=47 // pred_fallthru
          _
      $region48: #{tpu_custom_call.1} parent=5 // pred_fallthru
        _
      %p290 = scmp.le.s32.totalorder 1, %s18
      %p291 = scmp.lt.s32.totalorder %s18, 3
      %p292 = pnand %p290, %p291
      %p293 = pneg %p292
      // Predicated region
      $region53: #{tpu_custom_call.1} parent=5 // pred_check
        _
      $region54: #{tpu_custom_call.1} parent=5 // pred_check_branch
        %295 = sbr.rel (%p292) target = $region56
      $region55: #{tpu_custom_call.1} parent=5 // pred_region
        %s296 = ssub.s32 %s18, 1
        %s297 = smul.u32 8, %s23
        %p298 = scmp.lt.s32.totalorder %s297, 15
        %s299 = scalar_select %p298, %s297, 15
        %s300 = smul.addr %s299, 2
        %s301 = scalar_lea.vmem %s0, %s300
        %p302 = pneg %p44
        %p303 = pneg %p41
        %p304 = pneg %p65
        %p305 = pneg %p62
        %p306 = pneg %p86
        %p307 = pneg %p83
        %p308 = pneg %p107
        %p309 = pneg %p104
        %p310 = pneg %p128
        %p311 = pneg %p125
        %p312 = pneg %p149
        %p313 = pneg %p146
        %p314 = pneg %p170
        %p315 = pneg %p167
        %p316 = pneg %p191
        %p317 = pneg %p188
        %p318 = pneg %p212
        %p319 = pneg %p209
        %p320 = pneg %p238
        %p321 = pneg %p235
        %s322 = sand.u32 %s225, 1
        %s323 = scalar_lea.sflag [#allocation3], %s322
        %s324 = sand.u32 %s225, 1
        %s325 = smul.addr %s324, 32
        %s326 = scalar_lea.vmem [#allocation2], %s325
        %s327 = smul.u32 8, %s23
        %p328 = scmp.lt.s32.totalorder %s327, 15
        %s329 = scalar_select %p328, %s327, 15
        %s330 = smul.addr %s329, 2
        %s331 = scalar_lea.vmem %s0, %s330
        %s332 = smul.u32 8, %s23
        %s333 = smul.u32 8, %s23
        %v335 = vld [vmem:[%s331] sm:$0xff]
        %v336 = vld [vmem:[%s331 + $0x8] sm:$0xff]
        %v337 = vld [vmem:[%s1] sm:$0xff]
        %v338 = vld [vmem:[%s1 + $0x8] sm:$0xff]
        %v339 = vld [vmem:[%s1 + $0x10] sm:$0xff]
        %v340 = vld [vmem:[%s1 + $0x18] sm:$0xff]
        %v341 = vld [vmem:[%s2] sm:$0xff]
        %v342 = vld [vmem:[%s2 + $0x8] sm:$0xff]
        %v343 = vld [vmem:[%s2 + $0x10] sm:$0xff]
        %v344 = vld [vmem:[%s2 + $0x18] sm:$0xff]
        %346 = vset.pattern.permute.xlu0 0
        %347 = vperm.xlu0 %346, %v337
        %v348 = vpop.permute.xlu0 %347
        %351 = vset.pattern.permute.xlu0 0
        %352 = vperm.xlu0 %351, %v338
        %v353 = vpop.permute.xlu0 %352
        %356 = vset.pattern.permute.xlu0 0
        %357 = vperm.xlu0 %356, %v339
        %v358 = vpop.permute.xlu0 %357
        %361 = vset.pattern.permute.xlu0 0
        %362 = vperm.xlu0 %361, %v340
        %v363 = vpop.permute.xlu0 %362
        %v367 = vlaneseq
        %v368 = vshrl.u32 %v367, 7
        %v369 = vsub.s32 0, %v368
        %v370 = vrot.slane %v335, %v369
        %v371 = vlaneseq
        %v372 = vshrl.u32 %v371, 7
        %v373 = vsub.s32 2, %v372
        %v374 = vrot.slane %v335, %v373
        %v375 = vlaneseq
        %v376 = vshrl.u32 %v375, 7
        %v377 = vsub.s32 4, %v376
        %v378 = vrot.slane %v335, %v377
        %v379 = vlaneseq
        %v380 = vshrl.u32 %v379, 7
        %v381 = vsub.s32 6, %v380
        %v382 = vrot.slane %v335, %v381
        %v383 = vlaneseq
        %v384 = vshrl.u32 %v383, 7
        %v385 = vsub.s32 0, %v384
        %v386 = vrot.slane %v336, %v385
        %v387 = vlaneseq
        %v388 = vshrl.u32 %v387, 7
        %v389 = vsub.s32 2, %v388
        %v390 = vrot.slane %v336, %v389
        %v391 = vlaneseq
        %v392 = vshrl.u32 %v391, 7
        %v393 = vsub.s32 4, %v392
        %v394 = vrot.slane %v336, %v393
        %v395 = vlaneseq
        %v396 = vshrl.u32 %v395, 7
        %v397 = vsub.s32 6, %v396
        %v398 = vrot.slane %v336, %v397
        %v407 = vlaneseq
        %v408 = vshrl.u32 %v407, 7
        %v409 = vsub.s32 0, %v408
        %v410 = vrot.slane %v370, %v409
        %v411 = vlaneseq
        %v412 = vshrl.u32 %v411, 7
        %v413 = vsub.s32 0, %v412
        %v414 = vrot.slane %v374, %v413
        %v415 = vlaneseq
        %v416 = vshrl.u32 %v415, 7
        %v417 = vsub.s32 0, %v416
        %v418 = vrot.slane %v378, %v417
        %v419 = vlaneseq
        %v420 = vshrl.u32 %v419, 7
        %v421 = vsub.s32 0, %v420
        %v422 = vrot.slane %v382, %v421
        %v423 = vlaneseq
        %v424 = vshrl.u32 %v423, 7
        %v425 = vsub.s32 0, %v424
        %v426 = vrot.slane %v386, %v425
        %v427 = vlaneseq
        %v428 = vshrl.u32 %v427, 7
        %v429 = vsub.s32 0, %v428
        %v430 = vrot.slane %v390, %v429
        %v431 = vlaneseq
        %v432 = vshrl.u32 %v431, 7
        %v433 = vsub.s32 0, %v432
        %v434 = vrot.slane %v394, %v433
        %v435 = vlaneseq
        %v436 = vshrl.u32 %v435, 7
        %v437 = vsub.s32 0, %v436
        %v438 = vrot.slane %v398, %v437
        %v439 = vmul.f32 %v348, %v410
        %v440 = vmul.f32 %v348, %v414
        %v441 = vmul.f32 %v348, %v418
        %v442 = vmul.f32 %v348, %v422
        %v443 = vmul.f32 %v348, %v426
        %v444 = vmul.f32 %v348, %v430
        %v445 = vmul.f32 %v348, %v434
        %v446 = vmul.f32 %v348, %v438
        %v447 = vmul.f32 %v353, %v410
        %v448 = vmul.f32 %v353, %v414
        %v449 = vmul.f32 %v353, %v418
        %v450 = vmul.f32 %v353, %v422
        %v451 = vmul.f32 %v353, %v426
        %v452 = vmul.f32 %v353, %v430
        %v453 = vmul.f32 %v353, %v434
        %v454 = vmul.f32 %v353, %v438
        %v455 = vmul.f32 %v358, %v410
        %v456 = vmul.f32 %v358, %v414
        %v457 = vmul.f32 %v358, %v418
        %v458 = vmul.f32 %v358, %v422
        %v459 = vmul.f32 %v358, %v426
        %v460 = vmul.f32 %v358, %v430
        %v461 = vmul.f32 %v358, %v434
        %v462 = vmul.f32 %v358, %v438
        %v463 = vmul.f32 %v363, %v410
        %v464 = vmul.f32 %v363, %v414
        %v465 = vmul.f32 %v363, %v418
        %v466 = vmul.f32 %v363, %v422
        %v467 = vmul.f32 %v363, %v426
        %v468 = vmul.f32 %v363, %v430
        %v469 = vmul.f32 %v363, %v434
        %v470 = vmul.f32 %v363, %v438
        %472 = vset.pattern.permute.xlu0 0
        %473 = vperm.xlu0 %472, %v341
        %v474 = vpop.permute.xlu0 %473
        %477 = vset.pattern.permute.xlu0 0
        %478 = vperm.xlu0 %477, %v342
        %v479 = vpop.permute.xlu0 %478
        %482 = vset.pattern.permute.xlu0 0
        %483 = vperm.xlu0 %482, %v343
        %v484 = vpop.permute.xlu0 %483
        %487 = vset.pattern.permute.xlu0 0
        %488 = vperm.xlu0 %487, %v344
        %v489 = vpop.permute.xlu0 %488
        %v491 = vadd.f32 %v474, %v439
        %v492 = vadd.f32 %v474, %v440
        %v493 = vadd.f32 %v474, %v441
        %v494 = vadd.f32 %v474, %v442
        %v495 = vadd.f32 %v474, %v443
        %v496 = vadd.f32 %v474, %v444
        %v497 = vadd.f32 %v474, %v445
        %v498 = vadd.f32 %v474, %v446
        %v499 = vadd.f32 %v479, %v447
        %v500 = vadd.f32 %v479, %v448
        %v501 = vadd.f32 %v479, %v449
        %v502 = vadd.f32 %v479, %v450
        %v503 = vadd.f32 %v479, %v451
        %v504 = vadd.f32 %v479, %v452
        %v505 = vadd.f32 %v479, %v453
        %v506 = vadd.f32 %v479, %v454
        %v507 = vadd.f32 %v484, %v455
        %v508 = vadd.f32 %v484, %v456
        %v509 = vadd.f32 %v484, %v457
        %v510 = vadd.f32 %v484, %v458
        %v511 = vadd.f32 %v484, %v459
        %v512 = vadd.f32 %v484, %v460
        %v513 = vadd.f32 %v484, %v461
        %v514 = vadd.f32 %v484, %v462
        %v515 = vadd.f32 %v489, %v463
        %v516 = vadd.f32 %v489, %v464
        %v517 = vadd.f32 %v489, %v465
        %v518 = vadd.f32 %v489, %v466
        %v519 = vadd.f32 %v489, %v467
        %v520 = vadd.f32 %v489, %v468
        %v521 = vadd.f32 %v489, %v469
        %v522 = vadd.f32 %v489, %v470
        %523 = vset.pattern.permute.xlu0 1
        %524 = vperm.xlu0 %523, %v337
        %v525 = vpop.permute.xlu0 %524
        %527 = vset.pattern.permute.xlu0 1
        %528 = vperm.xlu0 %527, %v338
        %v529 = vpop.permute.xlu0 %528
        %531 = vset.pattern.permute.xlu0 1
        %532 = vperm.xlu0 %531, %v339
        %v533 = vpop.permute.xlu0 %532
        %535 = vset.pattern.permute.xlu0 1
        %536 = vperm.xlu0 %535, %v340
        %v537 = vpop.permute.xlu0 %536
        %v539 = vlaneseq
        %v540 = vshrl.u32 %v539, 7
        %v541 = vsub.s32 1, %v540
        %v542 = vrot.slane %v335, %v541
        %v543 = vlaneseq
        %v544 = vshrl.u32 %v543, 7
        %v545 = vsub.s32 3, %v544
        %v546 = vrot.slane %v335, %v545
        %v547 = vlaneseq
        %v548 = vshrl.u32 %v547, 7
        %v549 = vsub.s32 5, %v548
        %v550 = vrot.slane %v335, %v549
        %v551 = vlaneseq
        %v552 = vshrl.u32 %v551, 7
        %v553 = vsub.s32 7, %v552
        %v554 = vrot.slane %v335, %v553
        %v555 = vlaneseq
        %v556 = vshrl.u32 %v555, 7
        %v557 = vsub.s32 1, %v556
        %v558 = vrot.slane %v336, %v557
        %v559 = vlaneseq
        %v560 = vshrl.u32 %v559, 7
        %v561 = vsub.s32 3, %v560
        %v562 = vrot.slane %v336, %v561
        %v563 = vlaneseq
        %v564 = vshrl.u32 %v563, 7
        %v565 = vsub.s32 5, %v564
        %v566 = vrot.slane %v336, %v565
        %v567 = vlaneseq
        %v568 = vshrl.u32 %v567, 7
        %v569 = vsub.s32 7, %v568
        %v570 = vrot.slane %v336, %v569
        %v579 = vlaneseq
        %v580 = vshrl.u32 %v579, 7
        %v581 = vsub.s32 1, %v580
        %v582 = vrot.slane %v542, %v581
        %v583 = vlaneseq
        %v584 = vshrl.u32 %v583, 7
        %v585 = vsub.s32 1, %v584
        %v586 = vrot.slane %v546, %v585
        %v587 = vlaneseq
        %v588 = vshrl.u32 %v587, 7
        %v589 = vsub.s32 1, %v588
        %v590 = vrot.slane %v550, %v589
        %v591 = vlaneseq
        %v592 = vshrl.u32 %v591, 7
        %v593 = vsub.s32 1, %v592
        %v594 = vrot.slane %v554, %v593
        %v595 = vlaneseq
        %v596 = vshrl.u32 %v595, 7
        %v597 = vsub.s32 1, %v596
        %v598 = vrot.slane %v558, %v597
        %v599 = vlaneseq
        %v600 = vshrl.u32 %v599, 7
        %v601 = vsub.s32 1, %v600
        %v602 = vrot.slane %v562, %v601
        %v603 = vlaneseq
        %v604 = vshrl.u32 %v603, 7
        %v605 = vsub.s32 1, %v604
        %v606 = vrot.slane %v566, %v605
        %v607 = vlaneseq
        %v608 = vshrl.u32 %v607, 7
        %v609 = vsub.s32 1, %v608
        %v610 = vrot.slane %v570, %v609
        %v611 = vmul.f32 %v525, %v582
        %v612 = vmul.f32 %v525, %v586
        %v613 = vmul.f32 %v525, %v590
        %v614 = vmul.f32 %v525, %v594
        %v615 = vmul.f32 %v525, %v598
        %v616 = vmul.f32 %v525, %v602
        %v617 = vmul.f32 %v525, %v606
        %v618 = vmul.f32 %v525, %v610
        %v619 = vmul.f32 %v529, %v582
        %v620 = vmul.f32 %v529, %v586
        %v621 = vmul.f32 %v529, %v590
        %v622 = vmul.f32 %v529, %v594
        %v623 = vmul.f32 %v529, %v598
        %v624 = vmul.f32 %v529, %v602
        %v625 = vmul.f32 %v529, %v606
        %v626 = vmul.f32 %v529, %v610
        %v627 = vmul.f32 %v533, %v582
        %v628 = vmul.f32 %v533, %v586
        %v629 = vmul.f32 %v533, %v590
        %v630 = vmul.f32 %v533, %v594
        %v631 = vmul.f32 %v533, %v598
        %v632 = vmul.f32 %v533, %v602
        %v633 = vmul.f32 %v533, %v606
        %v634 = vmul.f32 %v533, %v610
        %v635 = vmul.f32 %v537, %v582
        %v636 = vmul.f32 %v537, %v586
        %v637 = vmul.f32 %v537, %v590
        %v638 = vmul.f32 %v537, %v594
        %v639 = vmul.f32 %v537, %v598
        %v640 = vmul.f32 %v537, %v602
        %v641 = vmul.f32 %v537, %v606
        %v642 = vmul.f32 %v537, %v610
        %v643 = vadd.f32 %v491, %v611
        %v644 = vadd.f32 %v492, %v612
        %v645 = vadd.f32 %v493, %v613
        %v646 = vadd.f32 %v494, %v614
        %v647 = vadd.f32 %v495, %v615
        %v648 = vadd.f32 %v496, %v616
        %v649 = vadd.f32 %v497, %v617
        %v650 = vadd.f32 %v498, %v618
        %v651 = vadd.f32 %v499, %v619
        %v652 = vadd.f32 %v500, %v620
        %v653 = vadd.f32 %v501, %v621
        %v654 = vadd.f32 %v502, %v622
        %v655 = vadd.f32 %v503, %v623
        %v656 = vadd.f32 %v504, %v624
        %v657 = vadd.f32 %v505, %v625
        %v658 = vadd.f32 %v506, %v626
        %v659 = vadd.f32 %v507, %v627
        %v660 = vadd.f32 %v508, %v628
        %v661 = vadd.f32 %v509, %v629
        %v662 = vadd.f32 %v510, %v630
        %v663 = vadd.f32 %v511, %v631
        %v664 = vadd.f32 %v512, %v632
        %v665 = vadd.f32 %v513, %v633
        %v666 = vadd.f32 %v514, %v634
        %v667 = vadd.f32 %v515, %v635
        %v668 = vadd.f32 %v516, %v636
        %v669 = vadd.f32 %v517, %v637
        %v670 = vadd.f32 %v518, %v638
        %v671 = vadd.f32 %v519, %v639
        %v672 = vadd.f32 %v520, %v640
        %v673 = vadd.f32 %v521, %v641
        %v674 = vadd.f32 %v522, %v642
        %v675 = vmul.f32 %v643, %v643
        %v676 = vmul.f32 %v644, %v644
        %v677 = vmul.f32 %v645, %v645
        %v678 = vmul.f32 %v646, %v646
        %v679 = vmul.f32 %v647, %v647
        %v680 = vmul.f32 %v648, %v648
        %v681 = vmul.f32 %v649, %v649
        %v682 = vmul.f32 %v650, %v650
        %v683 = vmul.f32 %v651, %v651
        %v684 = vmul.f32 %v652, %v652
        %v685 = vmul.f32 %v653, %v653
        %v686 = vmul.f32 %v654, %v654
        %v687 = vmul.f32 %v655, %v655
        %v688 = vmul.f32 %v656, %v656
        %v689 = vmul.f32 %v657, %v657
        %v690 = vmul.f32 %v658, %v658
        %v691 = vmul.f32 %v659, %v659
        %v692 = vmul.f32 %v660, %v660
        %v693 = vmul.f32 %v661, %v661
        %v694 = vmul.f32 %v662, %v662
        %v695 = vmul.f32 %v663, %v663
        %v696 = vmul.f32 %v664, %v664
        %v697 = vmul.f32 %v665, %v665
        %v698 = vmul.f32 %v666, %v666
        %v699 = vmul.f32 %v667, %v667
        %v700 = vmul.f32 %v668, %v668
        %v701 = vmul.f32 %v669, %v669
        %v702 = vmul.f32 %v670, %v670
        %v703 = vmul.f32 %v671, %v671
        %v704 = vmul.f32 %v672, %v672
        %v705 = vmul.f32 %v673, %v673
        %v706 = vmul.f32 %v674, %v674
        %v707 = vmul.f32 %v675, -100.0
        %v708 = vmul.f32 %v676, -100.0
        %v709 = vmul.f32 %v677, -100.0
        %v710 = vmul.f32 %v678, -100.0
        %v711 = vmul.f32 %v679, -100.0
        %v712 = vmul.f32 %v680, -100.0
        %v713 = vmul.f32 %v681, -100.0
        %v714 = vmul.f32 %v682, -100.0
        %v715 = vmul.f32 %v683, -100.0
        %v716 = vmul.f32 %v684, -100.0
        %v717 = vmul.f32 %v685, -100.0
        %v718 = vmul.f32 %v686, -100.0
        %v719 = vmul.f32 %v687, -100.0
        %v720 = vmul.f32 %v688, -100.0
        %v721 = vmul.f32 %v689, -100.0
        %v722 = vmul.f32 %v690, -100.0
        %v723 = vmul.f32 %v691, -100.0
        %v724 = vmul.f32 %v692, -100.0
        %v725 = vmul.f32 %v693, -100.0
        %v726 = vmul.f32 %v694, -100.0
        %v727 = vmul.f32 %v695, -100.0
        %v728 = vmul.f32 %v696, -100.0
        %v729 = vmul.f32 %v697, -100.0
        %v730 = vmul.f32 %v698, -100.0
        %v731 = vmul.f32 %v699, -100.0
        %v732 = vmul.f32 %v700, -100.0
        %v733 = vmul.f32 %v701, -100.0
        %v734 = vmul.f32 %v702, -100.0
        %v735 = vmul.f32 %v703, -100.0
        %v736 = vmul.f32 %v704, -100.0
        %v737 = vmul.f32 %v705, -100.0
        %v738 = vmul.f32 %v706, -100.0
        %v739 = vmul.f32 %v707, 1.442695
        %v740 = vpow.pop %v739
        %v741 = vmul.f32 %v708, 1.442695
        %v742 = vpow.pop %v741
        %v743 = vmul.f32 %v709, 1.442695
        %v744 = vpow.pop %v743
        %v745 = vmul.f32 %v710, 1.442695
        %v746 = vpow.pop %v745
        %v747 = vmul.f32 %v711, 1.442695
        %v748 = vpow.pop %v747
        %v749 = vmul.f32 %v712, 1.442695
        %v750 = vpow.pop %v749
        %v751 = vmul.f32 %v713, 1.442695
        %v752 = vpow.pop %v751
        %v753 = vmul.f32 %v714, 1.442695
        %v754 = vpow.pop %v753
        %v755 = vmul.f32 %v715, 1.442695
        %v756 = vpow.pop %v755
        %v757 = vmul.f32 %v716, 1.442695
        %v758 = vpow.pop %v757
        %v759 = vmul.f32 %v717, 1.442695
        %v760 = vpow.pop %v759
        %v761 = vmul.f32 %v718, 1.442695
        %v762 = vpow.pop %v761
        %v763 = vmul.f32 %v719, 1.442695
        %v764 = vpow.pop %v763
        %v765 = vmul.f32 %v720, 1.442695
        %v766 = vpow.pop %v765
        %v767 = vmul.f32 %v721, 1.442695
        %v768 = vpow.pop %v767
        %v769 = vmul.f32 %v722, 1.442695
        %v770 = vpow.pop %v769
        %v771 = vmul.f32 %v723, 1.442695
        %v772 = vpow.pop %v771
        %v773 = vmul.f32 %v724, 1.442695
        %v774 = vpow.pop %v773
        %v775 = vmul.f32 %v725, 1.442695
        %v776 = vpow.pop %v775
        %v777 = vmul.f32 %v726, 1.442695
        %v778 = vpow.pop %v777
        %v779 = vmul.f32 %v727, 1.442695
        %v780 = vpow.pop %v779
        %v781 = vmul.f32 %v728, 1.442695
        %v782 = vpow.pop %v781
        %v783 = vmul.f32 %v729, 1.442695
        %v784 = vpow.pop %v783
        %v785 = vmul.f32 %v730, 1.442695
        %v786 = vpow.pop %v785
        %v787 = vmul.f32 %v731, 1.442695
        %v788 = vpow.pop %v787
        %v789 = vmul.f32 %v732, 1.442695
        %v790 = vpow.pop %v789
        %v791 = vmul.f32 %v733, 1.442695
        %v792 = vpow.pop %v791
        %v793 = vmul.f32 %v734, 1.442695
        %v794 = vpow.pop %v793
        %v795 = vmul.f32 %v735, 1.442695
        %v796 = vpow.pop %v795
        %v797 = vmul.f32 %v736, 1.442695
        %v798 = vpow.pop %v797
        %v799 = vmul.f32 %v737, 1.442695
        %v800 = vpow.pop %v799
        %v801 = vmul.f32 %v738, 1.442695
        %v802 = vpow.pop %v801
        %v803 = vld [vmem:[%s3] sm:$0xf]
        %v804 = vld [vmem:[%s3 + $0x4] sm:$0xf]
        %v805 = vld [vmem:[%s3 + $0x8] sm:$0xf]
        %v806 = vld [vmem:[%s3 + $0xc] sm:$0xf]
        %v807 = vld [vmem:[%s4] sm:$0xff]
        %v808 = vld [vmem:[%s4 + $0x8] sm:$0xff]
        %v809 = vld [vmem:[%s4 + $0x10] sm:$0xff]
        %v810 = vld [vmem:[%s4 + $0x18] sm:$0xff]
        %v811 = vpack.c.bf16 %v756, %v740
        %v812 = vpack.c.bf16 %v758, %v742
        %v813 = vpack.c.bf16 %v760, %v744
        %v814 = vpack.c.bf16 %v762, %v746
        %v815 = vpack.c.bf16 %v764, %v748
        %v816 = vpack.c.bf16 %v766, %v750
        %v817 = vpack.c.bf16 %v768, %v752
        %v818 = vpack.c.bf16 %v770, %v754
        %v819 = vpack.c.bf16 %v788, %v772
        %v820 = vpack.c.bf16 %v790, %v774
        %v821 = vpack.c.bf16 %v792, %v776
        %v822 = vpack.c.bf16 %v794, %v778
        %v823 = vpack.c.bf16 %v796, %v780
        %v824 = vpack.c.bf16 %v798, %v782
        %v825 = vpack.c.bf16 %v800, %v784
        %v826 = vpack.c.bf16 %v802, %v786
        %828 = vset.pattern.permute.xlu0 0
        %829 = vperm.xlu0 %828, %v807
        %v830 = vpop.permute.xlu0 %829
        %833 = vset.pattern.permute.xlu0 0
        %834 = vperm.xlu0 %833, %v808
        %v835 = vpop.permute.xlu0 %834
        %838 = vset.pattern.permute.xlu0 0
        %839 = vperm.xlu0 %838, %v809
        %v840 = vpop.permute.xlu0 %839
        %843 = vset.pattern.permute.xlu0 0
        %844 = vperm.xlu0 %843, %v810
        %v845 = vpop.permute.xlu0 %844
        %v851 = vunpack.c.l.b16 %v803
        %v852 = vunpack.c.l.b16 %v804
        %v853 = vunpack.c.l.b16 %v805
        %v854 = vunpack.c.l.b16 %v806
        %v855 = vpack.c.b16 %v852, %v851
        %v856 = vpack.c.b16 %v854, %v853
        %vm857 = vcmask 261120
        %v859 = vsel %vm857, %v855, 0
        %v862 = vsel %vm857, %v856, 0
        %864 = vmatprep.subr.bf16.mxu0 0
        %865 = vmatpush1.bf16.msra.mxu0 0
        %866 = vmatprep.subr.bf16.mxu0 0
        %867 = vmatpush1.bf16.msra.mxu0 0
        %868 = vmatprep.subr.bf16.mxu0 0
        %869 = vmatpush1.bf16.msra.mxu0 0
        %870 = vmatprep.subr.bf16.mxu0 0
        %871 = vmatpush1.bf16.msra.mxu0 0
        %872 = vmatprep.subr.bf16.mxu0 0
        %873 = vmatpush1.bf16.msra.mxu0 0
        %874 = vmatprep.subr.bf16.mxu0 0
        %875 = vmatpush1.bf16.msra.mxu0 0
        %876 = vmatprep.subr.bf16.mxu0 %v820
        %877 = vmatpush1.bf16.msra.mxu0 %v819
        %878 = vmatprep.subr.bf16.mxu0 %v812
        %879 = vmatpush1.bf16.msra.mxu0 %v811
        %880 = vmatprep.subr.bf16.mxu0 0
        %881 = vmatpush2.bf16.msra.mxu0 0
        %882 = vmatprep.subr.bf16.mxu0 0
        %883 = vmatpush2.bf16.msra.mxu0 0
        %884 = vmatprep.subr.bf16.mxu0 0
        %885 = vmatpush2.bf16.msra.mxu0 0
        %886 = vmatprep.subr.bf16.mxu0 0
        %887 = vmatpush2.bf16.msra.mxu0 0
        %888 = vmatprep.subr.bf16.mxu0 0
        %889 = vmatpush2.bf16.msra.mxu0 0
        %890 = vmatprep.subr.bf16.mxu0 0
        %891 = vmatpush2.bf16.msra.mxu0 0
        %892 = vmatprep.subr.bf16.mxu0 0
        %893 = vmatpush2.bf16.msra.mxu0 0
        %894 = vmatprep.subr.bf16.mxu0 0
        %895 = vmatpush2.bf16.msra.mxu0 0
        %896 = vmatprep.mubr.bf16.mxu0 0
        %897 = vmatmul.mubr.bf16.gmra.mxu0 %v859
        %v898 = vpop.f32.mrf.mxu0
        %v899 = vadd.f32 %v830, %v898
        %v900 = vpop.f32.mrf.mxu0
        %v901 = vadd.f32 %v830, %v900
        %v902 = vpop.f32.mrf.mxu0
        %v903 = vadd.f32 %v835, %v902
        %v904 = vpop.f32.mrf.mxu0
        %v905 = vadd.f32 %v835, %v904
        %906 = vmatprep.mubr.bf16.mxu0 0
        %907 = vmatmul.mubr.bf16.gmra.mxu0 %v862
        %v908 = vpop.f32.mrf.mxu0
        %v909 = vadd.f32 %v840, %v908
        %v910 = vpop.f32.mrf.mxu0
        %v911 = vadd.f32 %v840, %v910
        %v912 = vpop.f32.mrf.mxu0
        %v913 = vadd.f32 %v845, %v912
        %v914 = vpop.f32.mrf.mxu0
        %v915 = vadd.f32 %v845, %v914
        %916 = vdwg.mxu0
        %917 = vmatprep.subr.bf16.mxu0 0
        %918 = vmatpush1.bf16.msra.mxu0 0
        %919 = vmatprep.subr.bf16.mxu0 0
        %920 = vmatpush1.bf16.msra.mxu0 0
        %921 = vmatprep.subr.bf16.mxu0 0
        %922 = vmatpush1.bf16.msra.mxu0 0
        %923 = vmatprep.subr.bf16.mxu0 0
        %924 = vmatpush1.bf16.msra.mxu0 0
        %925 = vmatprep.subr.bf16.mxu0 0
        %926 = vmatpush1.bf16.msra.mxu0 0
        %927 = vmatprep.subr.bf16.mxu0 0
        %928 = vmatpush1.bf16.msra.mxu0 0
        %929 = vmatprep.subr.bf16.mxu0 %v822
        %930 = vmatpush1.bf16.msra.mxu0 %v821
        %931 = vmatprep.subr.bf16.mxu0 %v814
        %932 = vmatpush1.bf16.msra.mxu0 %v813
        %933 = vmatprep.subr.bf16.mxu0 0
        %934 = vmatpush2.bf16.msra.mxu0 0
        %935 = vmatprep.subr.bf16.mxu0 0
        %936 = vmatpush2.bf16.msra.mxu0 0
        %937 = vmatprep.subr.bf16.mxu0 0
        %938 = vmatpush2.bf16.msra.mxu0 0
        %939 = vmatprep.subr.bf16.mxu0 0
        %940 = vmatpush2.bf16.msra.mxu0 0
        %941 = vmatprep.subr.bf16.mxu0 0
        %942 = vmatpush2.bf16.msra.mxu0 0
        %943 = vmatprep.subr.bf16.mxu0 0
        %944 = vmatpush2.bf16.msra.mxu0 0
        %945 = vmatprep.subr.bf16.mxu0 0
        %946 = vmatpush2.bf16.msra.mxu0 0
        %947 = vmatprep.subr.bf16.mxu0 0
        %948 = vmatpush2.bf16.msra.mxu0 0
        %949 = vmatprep.mubr.bf16.mxu0 0
        %950 = vmatmul.mubr.bf16.gmra.mxu0 %v859
        %v951 = vpop.f32.mrf.mxu0
        %v952 = vadd.f32 %v830, %v951
        %v953 = vpop.f32.mrf.mxu0
        %v954 = vadd.f32 %v830, %v953
        %v955 = vpop.f32.mrf.mxu0
        %v956 = vadd.f32 %v835, %v955
        %v957 = vpop.f32.mrf.mxu0
        %v958 = vadd.f32 %v835, %v957
        %959 = vmatprep.mubr.bf16.mxu0 0
        %960 = vmatmul.mubr.bf16.gmra.mxu0 %v862
        %v961 = vpop.f32.mrf.mxu0
        %v962 = vadd.f32 %v840, %v961
        %v963 = vpop.f32.mrf.mxu0
        %v964 = vadd.f32 %v840, %v963
        %v965 = vpop.f32.mrf.mxu0
        %v966 = vadd.f32 %v845, %v965
        %v967 = vpop.f32.mrf.mxu0
        %v968 = vadd.f32 %v845, %v967
        %969 = vdwg.mxu0
        %970 = vmatprep.subr.bf16.mxu0 0
        %971 = vmatpush1.bf16.msra.mxu0 0
        %972 = vmatprep.subr.bf16.mxu0 0
        %973 = vmatpush1.bf16.msra.mxu0 0
        %974 = vmatprep.subr.bf16.mxu0 0
        %975 = vmatpush1.bf16.msra.mxu0 0
        %976 = vmatprep.subr.bf16.mxu0 0
        %977 = vmatpush1.bf16.msra.mxu0 0
        %978 = vmatprep.subr.bf16.mxu0 0
        %979 = vmatpush1.bf16.msra.mxu0 0
        %980 = vmatprep.subr.bf16.mxu0 0
        %981 = vmatpush1.bf16.msra.mxu0 0
        %982 = vmatprep.subr.bf16.mxu0 %v824
        %983 = vmatpush1.bf16.msra.mxu0 %v823
        %984 = vmatprep.subr.bf16.mxu0 %v816
        %985 = vmatpush1.bf16.msra.mxu0 %v815
        %986 = vmatprep.subr.bf16.mxu0 0
        %987 = vmatpush2.bf16.msra.mxu0 0
        %988 = vmatprep.subr.bf16.mxu0 0
        %989 = vmatpush2.bf16.msra.mxu0 0
        %990 = vmatprep.subr.bf16.mxu0 0
        %991 = vmatpush2.bf16.msra.mxu0 0
        %992 = vmatprep.subr.bf16.mxu0 0
        %993 = vmatpush2.bf16.msra.mxu0 0
        %994 = vmatprep.subr.bf16.mxu0 0
        %995 = vmatpush2.bf16.msra.mxu0 0
        %996 = vmatprep.subr.bf16.mxu0 0
        %997 = vmatpush2.bf16.msra.mxu0 0
        %998 = vmatprep.subr.bf16.mxu0 0
        %999 = vmatpush2.bf16.msra.mxu0 0
        %1000 = vmatprep.subr.bf16.mxu0 0
        %1001 = vmatpush2.bf16.msra.mxu0 0
        %1002 = vmatprep.mubr.bf16.mxu0 0
        %1003 = vmatmul.mubr.bf16.gmra.mxu0 %v859
        %v1004 = vpop.f32.mrf.mxu0
        %v1005 = vadd.f32 %v830, %v1004
        %v1006 = vpop.f32.mrf.mxu0
        %v1007 = vadd.f32 %v830, %v1006
        %v1008 = vpop.f32.mrf.mxu0
        %v1009 = vadd.f32 %v835, %v1008
        %v1010 = vpop.f32.mrf.mxu0
        %v1011 = vadd.f32 %v835, %v1010
        %1012 = vmatprep.mubr.bf16.mxu0 0
        %1013 = vmatmul.mubr.bf16.gmra.mxu0 %v862
        %v1014 = vpop.f32.mrf.mxu0
        %v1015 = vadd.f32 %v840, %v1014
        %v1016 = vpop.f32.mrf.mxu0
        %v1017 = vadd.f32 %v840, %v1016
        %v1018 = vpop.f32.mrf.mxu0
        %v1019 = vadd.f32 %v845, %v1018
        %v1020 = vpop.f32.mrf.mxu0
        %v1021 = vadd.f32 %v845, %v1020
        %1022 = vdwg.mxu0
        %1023 = vmatprep.subr.bf16.mxu0 0
        %1024 = vmatpush1.bf16.msra.mxu0 0
        %1025 = vmatprep.subr.bf16.mxu0 0
        %1026 = vmatpush1.bf16.msra.mxu0 0
        %1027 = vmatprep.subr.bf16.mxu0 0
        %1028 = vmatpush1.bf16.msra.mxu0 0
        %1029 = vmatprep.subr.bf16.mxu0 0
        %1030 = vmatpush1.bf16.msra.mxu0 0
        %1031 = vmatprep.subr.bf16.mxu0 0
        %1032 = vmatpush1.bf16.msra.mxu0 0
        %1033 = vmatprep.subr.bf16.mxu0 0
        %1034 = vmatpush1.bf16.msra.mxu0 0
        %1035 = vmatprep.subr.bf16.mxu0 %v826
        %1036 = vmatpush1.bf16.msra.mxu0 %v825
        %1037 = vmatprep.subr.bf16.mxu0 %v818
        %1038 = vmatpush1.bf16.msra.mxu0 %v817
        %1039 = vmatprep.subr.bf16.mxu0 0
        %1040 = vmatpush2.bf16.msra.mxu0 0
        %1041 = vmatprep.subr.bf16.mxu0 0
        %1042 = vmatpush2.bf16.msra.mxu0 0
        %1043 = vmatprep.subr.bf16.mxu0 0
        %1044 = vmatpush2.bf16.msra.mxu0 0
        %1045 = vmatprep.subr.bf16.mxu0 0
        %1046 = vmatpush2.bf16.msra.mxu0 0
        %1047 = vmatprep.subr.bf16.mxu0 0
        %1048 = vmatpush2.bf16.msra.mxu0 0
        %1049 = vmatprep.subr.bf16.mxu0 0
        %1050 = vmatpush2.bf16.msra.mxu0 0
        %1051 = vmatprep.subr.bf16.mxu0 0
        %1052 = vmatpush2.bf16.msra.mxu0 0
        %1053 = vmatprep.subr.bf16.mxu0 0
        %1054 = vmatpush2.bf16.msra.mxu0 0
        %1055 = vmatprep.mubr.bf16.mxu0 0
        %1056 = vmatmul.mubr.bf16.gmra.mxu0 %v859
        %v1057 = vpop.f32.mrf.mxu0
        %v1058 = vadd.f32 %v830, %v1057
        %v1059 = vpop.f32.mrf.mxu0
        %v1060 = vadd.f32 %v830, %v1059
        %v1061 = vpop.f32.mrf.mxu0
        %v1062 = vadd.f32 %v835, %v1061
        %v1063 = vpop.f32.mrf.mxu0
        %v1064 = vadd.f32 %v835, %v1063
        %1065 = vmatprep.mubr.bf16.mxu0 0
        %1066 = vmatmul.mubr.bf16.gmra.mxu0 %v862
        %v1067 = vpop.f32.mrf.mxu0
        %v1068 = vadd.f32 %v840, %v1067
        %v1069 = vpop.f32.mrf.mxu0
        %v1070 = vadd.f32 %v840, %v1069
        %v1071 = vpop.f32.mrf.mxu0
        %v1072 = vadd.f32 %v845, %v1071
        %v1073 = vpop.f32.mrf.mxu0
        %v1074 = vadd.f32 %v845, %v1073
        %1075 = vdwg.mxu0
        %v1076 = vmul.f32 %v899, %v899
        %v1077 = vmul.f32 %v901, %v901
        %v1078 = vmul.f32 %v952, %v952
        %v1079 = vmul.f32 %v954, %v954
        %v1080 = vmul.f32 %v1005, %v1005
        %v1081 = vmul.f32 %v1007, %v1007
        %v1082 = vmul.f32 %v1058, %v1058
        %v1083 = vmul.f32 %v1060, %v1060
        %v1084 = vmul.f32 %v903, %v903
        %v1085 = vmul.f32 %v905, %v905
        %v1086 = vmul.f32 %v956, %v956
        %v1087 = vmul.f32 %v958, %v958
        %v1088 = vmul.f32 %v1009, %v1009
        %v1089 = vmul.f32 %v1011, %v1011
        %v1090 = vmul.f32 %v1062, %v1062
        %v1091 = vmul.f32 %v1064, %v1064
        %v1092 = vmul.f32 %v909, %v909
        %v1093 = vmul.f32 %v911, %v911
        %v1094 = vmul.f32 %v962, %v962
        %v1095 = vmul.f32 %v964, %v964
        %v1096 = vmul.f32 %v1015, %v1015
        %v1097 = vmul.f32 %v1017, %v1017
        %v1098 = vmul.f32 %v1068, %v1068
        %v1099 = vmul.f32 %v1070, %v1070
        %v1100 = vmul.f32 %v913, %v913
        %v1101 = vmul.f32 %v915, %v915
        %v1102 = vmul.f32 %v966, %v966
        %v1103 = vmul.f32 %v968, %v968
        %v1104 = vmul.f32 %v1019, %v1019
        %v1105 = vmul.f32 %v1021, %v1021
        %v1106 = vmul.f32 %v1072, %v1072
        %v1107 = vmul.f32 %v1074, %v1074
        %v1108 = vmul.f32 %v1076, -100.0
        %v1109 = vmul.f32 %v1077, -100.0
        %v1110 = vmul.f32 %v1078, -100.0
        %v1111 = vmul.f32 %v1079, -100.0
        %v1112 = vmul.f32 %v1080, -100.0
        %v1113 = vmul.f32 %v1081, -100.0
        %v1114 = vmul.f32 %v1082, -100.0
        %v1115 = vmul.f32 %v1083, -100.0
        %v1116 = vmul.f32 %v1084, -100.0
        %v1117 = vmul.f32 %v1085, -100.0
        %v1118 = vmul.f32 %v1086, -100.0
        %v1119 = vmul.f32 %v1087, -100.0
        %v1120 = vmul.f32 %v1088, -100.0
        %v1121 = vmul.f32 %v1089, -100.0
        %v1122 = vmul.f32 %v1090, -100.0
        %v1123 = vmul.f32 %v1091, -100.0
        %v1124 = vmul.f32 %v1092, -100.0
        %v1125 = vmul.f32 %v1093, -100.0
        %v1126 = vmul.f32 %v1094, -100.0
        %v1127 = vmul.f32 %v1095, -100.0
        %v1128 = vmul.f32 %v1096, -100.0
        %v1129 = vmul.f32 %v1097, -100.0
        %v1130 = vmul.f32 %v1098, -100.0
        %v1131 = vmul.f32 %v1099, -100.0
        %v1132 = vmul.f32 %v1100, -100.0
        %v1133 = vmul.f32 %v1101, -100.0
        %v1134 = vmul.f32 %v1102, -100.0
        %v1135 = vmul.f32 %v1103, -100.0
        %v1136 = vmul.f32 %v1104, -100.0
        %v1137 = vmul.f32 %v1105, -100.0
        %v1138 = vmul.f32 %v1106, -100.0
        %v1139 = vmul.f32 %v1107, -100.0
        %v1140 = vmul.f32 %v1108, 1.442695
        %v1141 = vpow.pop %v1140
        %v1142 = vmul.f32 %v1109, 1.442695
        %v1143 = vpow.pop %v1142
        %v1144 = vmul.f32 %v1110, 1.442695
        %v1145 = vpow.pop %v1144
        %v1146 = vmul.f32 %v1111, 1.442695
        %v1147 = vpow.pop %v1146
        %v1148 = vmul.f32 %v1112, 1.442695
        %v1149 = vpow.pop %v1148
        %v1150 = vmul.f32 %v1113, 1.442695
        %v1151 = vpow.pop %v1150
        %v1152 = vmul.f32 %v1114, 1.442695
        %v1153 = vpow.pop %v1152
        %v1154 = vmul.f32 %v1115, 1.442695
        %v1155 = vpow.pop %v1154
        %v1156 = vmul.f32 %v1116, 1.442695
        %v1157 = vpow.pop %v1156
        %v1158 = vmul.f32 %v1117, 1.442695
        %v1159 = vpow.pop %v1158
        %v1160 = vmul.f32 %v1118, 1.442695
        %v1161 = vpow.pop %v1160
        %v1162 = vmul.f32 %v1119, 1.442695
        %v1163 = vpow.pop %v1162
        %v1164 = vmul.f32 %v1120, 1.442695
        %v1165 = vpow.pop %v1164
        %v1166 = vmul.f32 %v1121, 1.442695
        %v1167 = vpow.pop %v1166
        %v1168 = vmul.f32 %v1122, 1.442695
        %v1169 = vpow.pop %v1168
        %v1170 = vmul.f32 %v1123, 1.442695
        %v1171 = vpow.pop %v1170
        %v1172 = vmul.f32 %v1124, 1.442695
        %v1173 = vpow.pop %v1172
        %v1174 = vmul.f32 %v1125, 1.442695
        %v1175 = vpow.pop %v1174
        %v1176 = vmul.f32 %v1126, 1.442695
        %v1177 = vpow.pop %v1176
        %v1178 = vmul.f32 %v1127, 1.442695
        %v1179 = vpow.pop %v1178
        %v1180 = vmul.f32 %v1128, 1.442695
        %v1181 = vpow.pop %v1180
        %v1182 = vmul.f32 %v1129, 1.442695
        %v1183 = vpow.pop %v1182
        %v1184 = vmul.f32 %v1130, 1.442695
        %v1185 = vpow.pop %v1184
        %v1186 = vmul.f32 %v1131, 1.442695
        %v1187 = vpow.pop %v1186
        %v1188 = vmul.f32 %v1132, 1.442695
        %v1189 = vpow.pop %v1188
        %v1190 = vmul.f32 %v1133, 1.442695
        %v1191 = vpow.pop %v1190
        %v1192 = vmul.f32 %v1134, 1.442695
        %v1193 = vpow.pop %v1192
        %v1194 = vmul.f32 %v1135, 1.442695
        %v1195 = vpow.pop %v1194
        %v1196 = vmul.f32 %v1136, 1.442695
        %v1197 = vpow.pop %v1196
        %v1198 = vmul.f32 %v1137, 1.442695
        %v1199 = vpow.pop %v1198
        %v1200 = vmul.f32 %v1138, 1.442695
        %v1201 = vpow.pop %v1200
        %v1202 = vmul.f32 %v1139, 1.442695
        %v1203 = vpow.pop %v1202
        %v1204 = vld [vmem:[%s5] sm:$0xf]
        %v1205 = vld [vmem:[%s5 + $0x4] sm:$0xf]
        %v1206 = vld [vmem:[%s5 + $0x8] sm:$0xf]
        %v1207 = vld [vmem:[%s5 + $0xc] sm:$0xf]
        %v1208 = vld [vmem:[%s6] sm:$0xff]
        %v1209 = vld [vmem:[%s6 + $0x8] sm:$0xff]
        %v1210 = vld [vmem:[%s6 + $0x10] sm:$0xff]
        %v1211 = vld [vmem:[%s6 + $0x18] sm:$0xff]
        %v1212 = vpack.c.bf16 %v1157, %v1141
        %v1213 = vpack.c.bf16 %v1159, %v1143
        %v1214 = vpack.c.bf16 %v1161, %v1145
        %v1215 = vpack.c.bf16 %v1163, %v1147
        %v1216 = vpack.c.bf16 %v1165, %v1149
        %v1217 = vpack.c.bf16 %v1167, %v1151
        %v1218 = vpack.c.bf16 %v1169, %v1153
        %v1219 = vpack.c.bf16 %v1171, %v1155
        %v1220 = vpack.c.bf16 %v1189, %v1173
        %v1221 = vpack.c.bf16 %v1191, %v1175
        %v1222 = vpack.c.bf16 %v1193, %v1177
        %v1223 = vpack.c.bf16 %v1195, %v1179
        %v1224 = vpack.c.bf16 %v1197, %v1181
        %v1225 = vpack.c.bf16 %v1199, %v1183
        %v1226 = vpack.c.bf16 %v1201, %v1185
        %v1227 = vpack.c.bf16 %v1203, %v1187
        %1229 = vset.pattern.permute.xlu0 0
        %1230 = vperm.xlu0 %1229, %v1208
        %v1231 = vpop.permute.xlu0 %1230
        %1234 = vset.pattern.permute.xlu0 0
        %1235 = vperm.xlu0 %1234, %v1209
        %v1236 = vpop.permute.xlu0 %1235
        %1239 = vset.pattern.permute.xlu0 0
        %1240 = vperm.xlu0 %1239, %v1210
        %v1241 = vpop.permute.xlu0 %1240
        %1244 = vset.pattern.permute.xlu0 0
        %1245 = vperm.xlu0 %1244, %v1211
        %v1246 = vpop.permute.xlu0 %1245
        %v1252 = vunpack.c.l.b16 %v1204
        %v1253 = vunpack.c.l.b16 %v1205
        %v1254 = vunpack.c.l.b16 %v1206
        %v1255 = vunpack.c.l.b16 %v1207
        %v1256 = vpack.c.b16 %v1253, %v1252
        %v1257 = vpack.c.b16 %v1255, %v1254
        %v1259 = vsel %vm857, %v1256, 0
        %v1262 = vsel %vm857, %v1257, 0
        %1264 = vmatprep.subr.bf16.mxu0 0
        %1265 = vmatpush1.bf16.msra.mxu0 0
        %1266 = vmatprep.subr.bf16.mxu0 0
        %1267 = vmatpush1.bf16.msra.mxu0 0
        %1268 = vmatprep.subr.bf16.mxu0 0
        %1269 = vmatpush1.bf16.msra.mxu0 0
        %1270 = vmatprep.subr.bf16.mxu0 0
        %1271 = vmatpush1.bf16.msra.mxu0 0
        %1272 = vmatprep.subr.bf16.mxu0 0
        %1273 = vmatpush1.bf16.msra.mxu0 0
        %1274 = vmatprep.subr.bf16.mxu0 0
        %1275 = vmatpush1.bf16.msra.mxu0 0
        %1276 = vmatprep.subr.bf16.mxu0 %v1221
        %1277 = vmatpush1.bf16.msra.mxu0 %v1220
        %1278 = vmatprep.subr.bf16.mxu0 %v1213
        %1279 = vmatpush1.bf16.msra.mxu0 %v1212
        %1280 = vmatprep.subr.bf16.mxu0 0
        %1281 = vmatpush2.bf16.msra.mxu0 0
        %1282 = vmatprep.subr.bf16.mxu0 0
        %1283 = vmatpush2.bf16.msra.mxu0 0
        %1284 = vmatprep.subr.bf16.mxu0 0
        %1285 = vmatpush2.bf16.msra.mxu0 0
        %1286 = vmatprep.subr.bf16.mxu0 0
        %1287 = vmatpush2.bf16.msra.mxu0 0
        %1288 = vmatprep.subr.bf16.mxu0 0
        %1289 = vmatpush2.bf16.msra.mxu0 0
        %1290 = vmatprep.subr.bf16.mxu0 0
        %1291 = vmatpush2.bf16.msra.mxu0 0
        %1292 = vmatprep.subr.bf16.mxu0 0
        %1293 = vmatpush2.bf16.msra.mxu0 0
        %1294 = vmatprep.subr.bf16.mxu0 0
        %1295 = vmatpush2.bf16.msra.mxu0 0
        %1296 = vmatprep.mubr.bf16.mxu0 0
        %1297 = vmatmul.mubr.bf16.gmra.mxu0 %v1259
        %v1298 = vpop.f32.mrf.mxu0
        %v1299 = vadd.f32 %v1231, %v1298
        %v1300 = vpop.f32.mrf.mxu0
        %v1301 = vadd.f32 %v1231, %v1300
        %v1302 = vpop.f32.mrf.mxu0
        %v1303 = vadd.f32 %v1236, %v1302
        %v1304 = vpop.f32.mrf.mxu0
        %v1305 = vadd.f32 %v1236, %v1304
        %1306 = vmatprep.mubr.bf16.mxu0 0
        %1307 = vmatmul.mubr.bf16.gmra.mxu0 %v1262
        %v1308 = vpop.f32.mrf.mxu0
        %v1309 = vadd.f32 %v1241, %v1308
        %v1310 = vpop.f32.mrf.mxu0
        %v1311 = vadd.f32 %v1241, %v1310
        %v1312 = vpop.f32.mrf.mxu0
        %v1313 = vadd.f32 %v1246, %v1312
        %v1314 = vpop.f32.mrf.mxu0
        %v1315 = vadd.f32 %v1246, %v1314
        %1316 = vdwg.mxu0
        %1317 = vmatprep.subr.bf16.mxu0 0
        %1318 = vmatpush1.bf16.msra.mxu0 0
        %1319 = vmatprep.subr.bf16.mxu0 0
        %1320 = vmatpush1.bf16.msra.mxu0 0
        %1321 = vmatprep.subr.bf16.mxu0 0
        %1322 = vmatpush1.bf16.msra.mxu0 0
        %1323 = vmatprep.subr.bf16.mxu0 0
        %1324 = vmatpush1.bf16.msra.mxu0 0
        %1325 = vmatprep.subr.bf16.mxu0 0
        %1326 = vmatpush1.bf16.msra.mxu0 0
        %1327 = vmatprep.subr.bf16.mxu0 0
        %1328 = vmatpush1.bf16.msra.mxu0 0
        %1329 = vmatprep.subr.bf16.mxu0 %v1223
        %1330 = vmatpush1.bf16.msra.mxu0 %v1222
        %1331 = vmatprep.subr.bf16.mxu0 %v1215
        %1332 = vmatpush1.bf16.msra.mxu0 %v1214
        %1333 = vmatprep.subr.bf16.mxu0 0
        %1334 = vmatpush2.bf16.msra.mxu0 0
        %1335 = vmatprep.subr.bf16.mxu0 0
        %1336 = vmatpush2.bf16.msra.mxu0 0
        %1337 = vmatprep.subr.bf16.mxu0 0
        %1338 = vmatpush2.bf16.msra.mxu0 0
        %1339 = vmatprep.subr.bf16.mxu0 0
        %1340 = vmatpush2.bf16.msra.mxu0 0
        %1341 = vmatprep.subr.bf16.mxu0 0
        %1342 = vmatpush2.bf16.msra.mxu0 0
        %1343 = vmatprep.subr.bf16.mxu0 0
        %1344 = vmatpush2.bf16.msra.mxu0 0
        %1345 = vmatprep.subr.bf16.mxu0 0
        %1346 = vmatpush2.bf16.msra.mxu0 0
        %1347 = vmatprep.subr.bf16.mxu0 0
        %1348 = vmatpush2.bf16.msra.mxu0 0
        %1349 = vmatprep.mubr.bf16.mxu0 0
        %1350 = vmatmul.mubr.bf16.gmra.mxu0 %v1259
        %v1351 = vpop.f32.mrf.mxu0
        %v1352 = vadd.f32 %v1231, %v1351
        %v1353 = vpop.f32.mrf.mxu0
        %v1354 = vadd.f32 %v1231, %v1353
        %v1355 = vpop.f32.mrf.mxu0
        %v1356 = vadd.f32 %v1236, %v1355
        %v1357 = vpop.f32.mrf.mxu0
        %v1358 = vadd.f32 %v1236, %v1357
        %1359 = vmatprep.mubr.bf16.mxu0 0
        %1360 = vmatmul.mubr.bf16.gmra.mxu0 %v1262
        %v1361 = vpop.f32.mrf.mxu0
        %v1362 = vadd.f32 %v1241, %v1361
        %v1363 = vpop.f32.mrf.mxu0
        %v1364 = vadd.f32 %v1241, %v1363
        %v1365 = vpop.f32.mrf.mxu0
        %v1366 = vadd.f32 %v1246, %v1365
        %v1367 = vpop.f32.mrf.mxu0
        %v1368 = vadd.f32 %v1246, %v1367
        %1369 = vdwg.mxu0
        %1370 = vmatprep.subr.bf16.mxu0 0
        %1371 = vmatpush1.bf16.msra.mxu0 0
        %1372 = vmatprep.subr.bf16.mxu0 0
        %1373 = vmatpush1.bf16.msra.mxu0 0
        %1374 = vmatprep.subr.bf16.mxu0 0
        %1375 = vmatpush1.bf16.msra.mxu0 0
        %1376 = vmatprep.subr.bf16.mxu0 0
        %1377 = vmatpush1.bf16.msra.mxu0 0
        %1378 = vmatprep.subr.bf16.mxu0 0
        %1379 = vmatpush1.bf16.msra.mxu0 0
        %1380 = vmatprep.subr.bf16.mxu0 0
        %1381 = vmatpush1.bf16.msra.mxu0 0
        %1382 = vmatprep.subr.bf16.mxu0 %v1225
        %1383 = vmatpush1.bf16.msra.mxu0 %v1224
        %1384 = vmatprep.subr.bf16.mxu0 %v1217
        %1385 = vmatpush1.bf16.msra.mxu0 %v1216
        %1386 = vmatprep.subr.bf16.mxu0 0
        %1387 = vmatpush2.bf16.msra.mxu0 0
        %1388 = vmatprep.subr.bf16.mxu0 0
        %1389 = vmatpush2.bf16.msra.mxu0 0
        %1390 = vmatprep.subr.bf16.mxu0 0
        %1391 = vmatpush2.bf16.msra.mxu0 0
        %1392 = vmatprep.subr.bf16.mxu0 0
        %1393 = vmatpush2.bf16.msra.mxu0 0
        %1394 = vmatprep.subr.bf16.mxu0 0
        %1395 = vmatpush2.bf16.msra.mxu0 0
        %1396 = vmatprep.subr.bf16.mxu0 0
        %1397 = vmatpush2.bf16.msra.mxu0 0
        %1398 = vmatprep.subr.bf16.mxu0 0
        %1399 = vmatpush2.bf16.msra.mxu0 0
        %1400 = vmatprep.subr.bf16.mxu0 0
        %1401 = vmatpush2.bf16.msra.mxu0 0
        %1402 = vmatprep.mubr.bf16.mxu0 0
        %1403 = vmatmul.mubr.bf16.gmra.mxu0 %v1259
        %v1404 = vpop.f32.mrf.mxu0
        %v1405 = vadd.f32 %v1231, %v1404
        %v1406 = vpop.f32.mrf.mxu0
        %v1407 = vadd.f32 %v1231, %v1406
        %v1408 = vpop.f32.mrf.mxu0
        %v1409 = vadd.f32 %v1236, %v1408
        %v1410 = vpop.f32.mrf.mxu0
        %v1411 = vadd.f32 %v1236, %v1410
        %1412 = vmatprep.mubr.bf16.mxu0 0
        %1413 = vmatmul.mubr.bf16.gmra.mxu0 %v1262
        %v1414 = vpop.f32.mrf.mxu0
        %v1415 = vadd.f32 %v1241, %v1414
        %v1416 = vpop.f32.mrf.mxu0
        %v1417 = vadd.f32 %v1241, %v1416
        %v1418 = vpop.f32.mrf.mxu0
        %v1419 = vadd.f32 %v1246, %v1418
        %v1420 = vpop.f32.mrf.mxu0
        %v1421 = vadd.f32 %v1246, %v1420
        %1422 = vdwg.mxu0
        %1423 = vmatprep.subr.bf16.mxu0 0
        %1424 = vmatpush1.bf16.msra.mxu0 0
        %1425 = vmatprep.subr.bf16.mxu0 0
        %1426 = vmatpush1.bf16.msra.mxu0 0
        %1427 = vmatprep.subr.bf16.mxu0 0
        %1428 = vmatpush1.bf16.msra.mxu0 0
        %1429 = vmatprep.subr.bf16.mxu0 0
        %1430 = vmatpush1.bf16.msra.mxu0 0
        %1431 = vmatprep.subr.bf16.mxu0 0
        %1432 = vmatpush1.bf16.msra.mxu0 0
        %1433 = vmatprep.subr.bf16.mxu0 0
        %1434 = vmatpush1.bf16.msra.mxu0 0
        %1435 = vmatprep.subr.bf16.mxu0 %v1227
        %1436 = vmatpush1.bf16.msra.mxu0 %v1226
        %1437 = vmatprep.subr.bf16.mxu0 %v1219
        %1438 = vmatpush1.bf16.msra.mxu0 %v1218
        %1439 = vmatprep.subr.bf16.mxu0 0
        %1440 = vmatpush2.bf16.msra.mxu0 0
        %1441 = vmatprep.subr.bf16.mxu0 0
        %1442 = vmatpush2.bf16.msra.mxu0 0
        %1443 = vmatprep.subr.bf16.mxu0 0
        %1444 = vmatpush2.bf16.msra.mxu0 0
        %1445 = vmatprep.subr.bf16.mxu0 0
        %1446 = vmatpush2.bf16.msra.mxu0 0
        %1447 = vmatprep.subr.bf16.mxu0 0
        %1448 = vmatpush2.bf16.msra.mxu0 0
        %1449 = vmatprep.subr.bf16.mxu0 0
        %1450 = vmatpush2.bf16.msra.mxu0 0
        %1451 = vmatprep.subr.bf16.mxu0 0
        %1452 = vmatpush2.bf16.msra.mxu0 0
        %1453 = vmatprep.subr.bf16.mxu0 0
        %1454 = vmatpush2.bf16.msra.mxu0 0
        %1455 = vmatprep.mubr.bf16.mxu0 0
        %1456 = vmatmul.mubr.bf16.gmra.mxu0 %v1259
        %v1457 = vpop.f32.mrf.mxu0
        %v1458 = vadd.f32 %v1231, %v1457
        %v1459 = vpop.f32.mrf.mxu0
        %v1460 = vadd.f32 %v1231, %v1459
        %v1461 = vpop.f32.mrf.mxu0
        %v1462 = vadd.f32 %v1236, %v1461
        %v1463 = vpop.f32.mrf.mxu0
        %v1464 = vadd.f32 %v1236, %v1463
        %1465 = vmatprep.mubr.bf16.mxu0 0
        %1466 = vmatmul.mubr.bf16.gmra.mxu0 %v1262
        %v1467 = vpop.f32.mrf.mxu0
        %v1468 = vadd.f32 %v1241, %v1467
        %v1469 = vpop.f32.mrf.mxu0
        %v1470 = vadd.f32 %v1241, %v1469
        %v1471 = vpop.f32.mrf.mxu0
        %v1472 = vadd.f32 %v1246, %v1471
        %v1473 = vpop.f32.mrf.mxu0
        %v1474 = vadd.f32 %v1246, %v1473
        %1475 = vdwg.mxu0
        %v1476 = vmul.f32 %v1299, %v1299
        %v1477 = vmul.f32 %v1301, %v1301
        %v1478 = vmul.f32 %v1352, %v1352
        %v1479 = vmul.f32 %v1354, %v1354
        %v1480 = vmul.f32 %v1405, %v1405
        %v1481 = vmul.f32 %v1407, %v1407
        %v1482 = vmul.f32 %v1458, %v1458
        %v1483 = vmul.f32 %v1460, %v1460
        %v1484 = vmul.f32 %v1303, %v1303
        %v1485 = vmul.f32 %v1305, %v1305
        %v1486 = vmul.f32 %v1356, %v1356
        %v1487 = vmul.f32 %v1358, %v1358
        %v1488 = vmul.f32 %v1409, %v1409
        %v1489 = vmul.f32 %v1411, %v1411
        %v1490 = vmul.f32 %v1462, %v1462
        %v1491 = vmul.f32 %v1464, %v1464
        %v1492 = vmul.f32 %v1309, %v1309
        %v1493 = vmul.f32 %v1311, %v1311
        %v1494 = vmul.f32 %v1362, %v1362
        %v1495 = vmul.f32 %v1364, %v1364
        %v1496 = vmul.f32 %v1415, %v1415
        %v1497 = vmul.f32 %v1417, %v1417
        %v1498 = vmul.f32 %v1468, %v1468
        %v1499 = vmul.f32 %v1470, %v1470
        %v1500 = vmul.f32 %v1313, %v1313
        %v1501 = vmul.f32 %v1315, %v1315
        %v1502 = vmul.f32 %v1366, %v1366
        %v1503 = vmul.f32 %v1368, %v1368
        %v1504 = vmul.f32 %v1419, %v1419
        %v1505 = vmul.f32 %v1421, %v1421
        %v1506 = vmul.f32 %v1472, %v1472
        %v1507 = vmul.f32 %v1474, %v1474
        %v1508 = vmul.f32 %v1476, -100.0
        %v1509 = vmul.f32 %v1477, -100.0
        %v1510 = vmul.f32 %v1478, -100.0
        %v1511 = vmul.f32 %v1479, -100.0
        %v1512 = vmul.f32 %v1480, -100.0
        %v1513 = vmul.f32 %v1481, -100.0
        %v1514 = vmul.f32 %v1482, -100.0
        %v1515 = vmul.f32 %v1483, -100.0
        %v1516 = vmul.f32 %v1484, -100.0
        %v1517 = vmul.f32 %v1485, -100.0
        %v1518 = vmul.f32 %v1486, -100.0
        %v1519 = vmul.f32 %v1487, -100.0
        %v1520 = vmul.f32 %v1488, -100.0
        %v1521 = vmul.f32 %v1489, -100.0
        %v1522 = vmul.f32 %v1490, -100.0
        %v1523 = vmul.f32 %v1491, -100.0
        %v1524 = vmul.f32 %v1492, -100.0
        %v1525 = vmul.f32 %v1493, -100.0
        %v1526 = vmul.f32 %v1494, -100.0
        %v1527 = vmul.f32 %v1495, -100.0
        %v1528 = vmul.f32 %v1496, -100.0
        %v1529 = vmul.f32 %v1497, -100.0
        %v1530 = vmul.f32 %v1498, -100.0
        %v1531 = vmul.f32 %v1499, -100.0
        %v1532 = vmul.f32 %v1500, -100.0
        %v1533 = vmul.f32 %v1501, -100.0
        %v1534 = vmul.f32 %v1502, -100.0
        %v1535 = vmul.f32 %v1503, -100.0
        %v1536 = vmul.f32 %v1504, -100.0
        %v1537 = vmul.f32 %v1505, -100.0
        %v1538 = vmul.f32 %v1506, -100.0
        %v1539 = vmul.f32 %v1507, -100.0
        %v1540 = vmul.f32 %v1508, 1.442695
        %v1541 = vpow.pop %v1540
        %v1542 = vmul.f32 %v1509, 1.442695
        %v1543 = vpow.pop %v1542
        %v1544 = vmul.f32 %v1510, 1.442695
        %v1545 = vpow.pop %v1544
        %v1546 = vmul.f32 %v1511, 1.442695
        %v1547 = vpow.pop %v1546
        %v1548 = vmul.f32 %v1512, 1.442695
        %v1549 = vpow.pop %v1548
        %v1550 = vmul.f32 %v1513, 1.442695
        %v1551 = vpow.pop %v1550
        %v1552 = vmul.f32 %v1514, 1.442695
        %v1553 = vpow.pop %v1552
        %v1554 = vmul.f32 %v1515, 1.442695
        %v1555 = vpow.pop %v1554
        %v1556 = vmul.f32 %v1516, 1.442695
        %v1557 = vpow.pop %v1556
        %v1558 = vmul.f32 %v1517, 1.442695
        %v1559 = vpow.pop %v1558
        %v1560 = vmul.f32 %v1518, 1.442695
        %v1561 = vpow.pop %v1560
        %v1562 = vmul.f32 %v1519, 1.442695
        %v1563 = vpow.pop %v1562
        %v1564 = vmul.f32 %v1520, 1.442695
        %v1565 = vpow.pop %v1564
        %v1566 = vmul.f32 %v1521, 1.442695
        %v1567 = vpow.pop %v1566
        %v1568 = vmul.f32 %v1522, 1.442695
        %v1569 = vpow.pop %v1568
        %v1570 = vmul.f32 %v1523, 1.442695
        %v1571 = vpow.pop %v1570
        %v1572 = vmul.f32 %v1524, 1.442695
        %v1573 = vpow.pop %v1572
        %v1574 = vmul.f32 %v1525, 1.442695
        %v1575 = vpow.pop %v1574
        %v1576 = vmul.f32 %v1526, 1.442695
        %v1577 = vpow.pop %v1576
        %v1578 = vmul.f32 %v1527, 1.442695
        %v1579 = vpow.pop %v1578
        %v1580 = vmul.f32 %v1528, 1.442695
        %v1581 = vpow.pop %v1580
        %v1582 = vmul.f32 %v1529, 1.442695
        %v1583 = vpow.pop %v1582
        %v1584 = vmul.f32 %v1530, 1.442695
        %v1585 = vpow.pop %v1584
        %v1586 = vmul.f32 %v1531, 1.442695
        %v1587 = vpow.pop %v1586
        %v1588 = vmul.f32 %v1532, 1.442695
        %v1589 = vpow.pop %v1588
        %v1590 = vmul.f32 %v1533, 1.442695
        %v1591 = vpow.pop %v1590
        %v1592 = vmul.f32 %v1534, 1.442695
        %v1593 = vpow.pop %v1592
        %v1594 = vmul.f32 %v1535, 1.442695
        %v1595 = vpow.pop %v1594
        %v1596 = vmul.f32 %v1536, 1.442695
        %v1597 = vpow.pop %v1596
        %v1598 = vmul.f32 %v1537, 1.442695
        %v1599 = vpow.pop %v1598
        %v1600 = vmul.f32 %v1538, 1.442695
        %v1601 = vpow.pop %v1600
        %v1602 = vmul.f32 %v1539, 1.442695
        %v1603 = vpow.pop %v1602
        %v1604 = vld [vmem:[%s7] sm:$0x3]
        %v1605 = vld [vmem:[%s8] sm:$0x7]
        %v1606 = vpack.c.bf16 %v1557, %v1541
        %v1607 = vpack.c.bf16 %v1559, %v1543
        %v1608 = vpack.c.bf16 %v1561, %v1545
        %v1609 = vpack.c.bf16 %v1563, %v1547
        %v1610 = vpack.c.bf16 %v1565, %v1549
        %v1611 = vpack.c.bf16 %v1567, %v1551
        %v1612 = vpack.c.bf16 %v1569, %v1553
        %v1613 = vpack.c.bf16 %v1571, %v1555
        %v1614 = vpack.c.bf16 %v1589, %v1573
        %v1615 = vpack.c.bf16 %v1591, %v1575
        %v1616 = vpack.c.bf16 %v1593, %v1577
        %v1617 = vpack.c.bf16 %v1595, %v1579
        %v1618 = vpack.c.bf16 %v1597, %v1581
        %v1619 = vpack.c.bf16 %v1599, %v1583
        %v1620 = vpack.c.bf16 %v1601, %v1585
        %v1621 = vpack.c.bf16 %v1603, %v1587
        %1623 = vset.pattern.permute.xlu0 0
        %1624 = vperm.xlu0 %1623, %v1605
        %v1625 = vpop.permute.xlu0 %1624
        %v1628 = vsel %vm857, %v1604, 0
        %1630 = vmatprep.subr.bf16.mxu0 0
        %1631 = vmatpush1.bf16.msra.mxu0 0
        %1632 = vmatprep.subr.bf16.mxu0 0
        %1633 = vmatpush1.bf16.msra.mxu0 0
        %1634 = vmatprep.subr.bf16.mxu0 0
        %1635 = vmatpush1.bf16.msra.mxu0 0
        %1636 = vmatprep.subr.bf16.mxu0 0
        %1637 = vmatpush1.bf16.msra.mxu0 0
        %1638 = vmatprep.subr.bf16.mxu0 0
        %1639 = vmatpush1.bf16.msra.mxu0 0
        %1640 = vmatprep.subr.bf16.mxu0 0
        %1641 = vmatpush1.bf16.msra.mxu0 0
        %1642 = vmatprep.subr.bf16.mxu0 %v1615
        %1643 = vmatpush1.bf16.msra.mxu0 %v1614
        %1644 = vmatprep.subr.bf16.mxu0 %v1607
        %1645 = vmatpush1.bf16.msra.mxu0 %v1606
        %1646 = vmatprep.subr.bf16.mxu0 0
        %1647 = vmatpush2.bf16.msra.mxu0 0
        %1648 = vmatprep.subr.bf16.mxu0 0
        %1649 = vmatpush2.bf16.msra.mxu0 0
        %1650 = vmatprep.subr.bf16.mxu0 0
        %1651 = vmatpush2.bf16.msra.mxu0 0
        %1652 = vmatprep.subr.bf16.mxu0 0
        %1653 = vmatpush2.bf16.msra.mxu0 0
        %1654 = vmatprep.subr.bf16.mxu0 0
        %1655 = vmatpush2.bf16.msra.mxu0 0
        %1656 = vmatprep.subr.bf16.mxu0 0
        %1657 = vmatpush2.bf16.msra.mxu0 0
        %1658 = vmatprep.subr.bf16.mxu0 0
        %1659 = vmatpush2.bf16.msra.mxu0 0
        %1660 = vmatprep.subr.bf16.mxu0 0
        %1661 = vmatpush2.bf16.msra.mxu0 0
        %1662 = vmatprep.mubr.bf16.mxu0 0
        %1663 = vmatmul.mubr.bf16.gmra.mxu0 %v1628
        %v1664 = vpop.f32.mrf.mxu0
        %v1665 = vadd.f32 %v1625, %v1664
        %v1666 = vpop.f32.mrf.mxu0
        %v1667 = vadd.f32 %v1625, %v1666
        %v1668 = vpop.f32.mrf.mxu0
        %v1669 = vpop.f32.mrf.mxu0
        %1670 = vdwg.mxu0
        %1671 = vmatprep.subr.bf16.mxu0 0
        %1672 = vmatpush1.bf16.msra.mxu0 0
        %1673 = vmatprep.subr.bf16.mxu0 0
        %1674 = vmatpush1.bf16.msra.mxu0 0
        %1675 = vmatprep.subr.bf16.mxu0 0
        %1676 = vmatpush1.bf16.msra.mxu0 0
        %1677 = vmatprep.subr.bf16.mxu0 0
        %1678 = vmatpush1.bf16.msra.mxu0 0
        %1679 = vmatprep.subr.bf16.mxu0 0
        %1680 = vmatpush1.bf16.msra.mxu0 0
        %1681 = vmatprep.subr.bf16.mxu0 0
        %1682 = vmatpush1.bf16.msra.mxu0 0
        %1683 = vmatprep.subr.bf16.mxu0 %v1617
        %1684 = vmatpush1.bf16.msra.mxu0 %v1616
        %1685 = vmatprep.subr.bf16.mxu0 %v1609
        %1686 = vmatpush1.bf16.msra.mxu0 %v1608
        %1687 = vmatprep.subr.bf16.mxu0 0
        %1688 = vmatpush2.bf16.msra.mxu0 0
        %1689 = vmatprep.subr.bf16.mxu0 0
        %1690 = vmatpush2.bf16.msra.mxu0 0
        %1691 = vmatprep.subr.bf16.mxu0 0
        %1692 = vmatpush2.bf16.msra.mxu0 0
        %1693 = vmatprep.subr.bf16.mxu0 0
        %1694 = vmatpush2.bf16.msra.mxu0 0
        %1695 = vmatprep.subr.bf16.mxu0 0
        %1696 = vmatpush2.bf16.msra.mxu0 0
        %1697 = vmatprep.subr.bf16.mxu0 0
        %1698 = vmatpush2.bf16.msra.mxu0 0
        %1699 = vmatprep.subr.bf16.mxu0 0
        %1700 = vmatpush2.bf16.msra.mxu0 0
        %1701 = vmatprep.subr.bf16.mxu0 0
        %1702 = vmatpush2.bf16.msra.mxu0 0
        %1703 = vmatprep.mubr.bf16.mxu0 0
        %1704 = vmatmul.mubr.bf16.gmra.mxu0 %v1628
        %v1705 = vpop.f32.mrf.mxu0
        %v1706 = vadd.f32 %v1625, %v1705
        %v1707 = vpop.f32.mrf.mxu0
        %v1708 = vadd.f32 %v1625, %v1707
        %v1709 = vpop.f32.mrf.mxu0
        %v1710 = vpop.f32.mrf.mxu0
        %1711 = vdwg.mxu0
        %1712 = vmatprep.subr.bf16.mxu0 0
        %1713 = vmatpush1.bf16.msra.mxu0 0
        %1714 = vmatprep.subr.bf16.mxu0 0
        %1715 = vmatpush1.bf16.msra.mxu0 0
        %1716 = vmatprep.subr.bf16.mxu0 0
        %1717 = vmatpush1.bf16.msra.mxu0 0
        %1718 = vmatprep.subr.bf16.mxu0 0
        %1719 = vmatpush1.bf16.msra.mxu0 0
        %1720 = vmatprep.subr.bf16.mxu0 0
        %1721 = vmatpush1.bf16.msra.mxu0 0
        %1722 = vmatprep.subr.bf16.mxu0 0
        %1723 = vmatpush1.bf16.msra.mxu0 0
        %1724 = vmatprep.subr.bf16.mxu0 %v1619
        %1725 = vmatpush1.bf16.msra.mxu0 %v1618
        %1726 = vmatprep.subr.bf16.mxu0 %v1611
        %1727 = vmatpush1.bf16.msra.mxu0 %v1610
        %1728 = vmatprep.subr.bf16.mxu0 0
        %1729 = vmatpush2.bf16.msra.mxu0 0
        %1730 = vmatprep.subr.bf16.mxu0 0
        %1731 = vmatpush2.bf16.msra.mxu0 0
        %1732 = vmatprep.subr.bf16.mxu0 0
        %1733 = vmatpush2.bf16.msra.mxu0 0
        %1734 = vmatprep.subr.bf16.mxu0 0
        %1735 = vmatpush2.bf16.msra.mxu0 0
        %1736 = vmatprep.subr.bf16.mxu0 0
        %1737 = vmatpush2.bf16.msra.mxu0 0
        %1738 = vmatprep.subr.bf16.mxu0 0
        %1739 = vmatpush2.bf16.msra.mxu0 0
        %1740 = vmatprep.subr.bf16.mxu0 0
        %1741 = vmatpush2.bf16.msra.mxu0 0
        %1742 = vmatprep.subr.bf16.mxu0 0
        %1743 = vmatpush2.bf16.msra.mxu0 0
        %1744 = vmatprep.mubr.bf16.mxu0 0
        %1745 = vmatmul.mubr.bf16.gmra.mxu0 %v1628
        %v1746 = vpop.f32.mrf.mxu0
        %v1747 = vadd.f32 %v1625, %v1746
        %v1748 = vpop.f32.mrf.mxu0
        %v1749 = vadd.f32 %v1625, %v1748
        %v1750 = vpop.f32.mrf.mxu0
        %v1751 = vpop.f32.mrf.mxu0
        %1752 = vdwg.mxu0
        %1753 = vmatprep.subr.bf16.mxu0 0
        %1754 = vmatpush1.bf16.msra.mxu0 0
        %1755 = vmatprep.subr.bf16.mxu0 0
        %1756 = vmatpush1.bf16.msra.mxu0 0
        %1757 = vmatprep.subr.bf16.mxu0 0
        %1758 = vmatpush1.bf16.msra.mxu0 0
        %1759 = vmatprep.subr.bf16.mxu0 0
        %1760 = vmatpush1.bf16.msra.mxu0 0
        %1761 = vmatprep.subr.bf16.mxu0 0
        %1762 = vmatpush1.bf16.msra.mxu0 0
        %1763 = vmatprep.subr.bf16.mxu0 0
        %1764 = vmatpush1.bf16.msra.mxu0 0
        %1765 = vmatprep.subr.bf16.mxu0 %v1621
        %1766 = vmatpush1.bf16.msra.mxu0 %v1620
        %1767 = vmatprep.subr.bf16.mxu0 %v1613
        %1768 = vmatpush1.bf16.msra.mxu0 %v1612
        %1769 = vmatprep.subr.bf16.mxu0 0
        %1770 = vmatpush2.bf16.msra.mxu0 0
        %1771 = vmatprep.subr.bf16.mxu0 0
        %1772 = vmatpush2.bf16.msra.mxu0 0
        %1773 = vmatprep.subr.bf16.mxu0 0
        %1774 = vmatpush2.bf16.msra.mxu0 0
        %1775 = vmatprep.subr.bf16.mxu0 0
        %1776 = vmatpush2.bf16.msra.mxu0 0
        %1777 = vmatprep.subr.bf16.mxu0 0
        %1778 = vmatpush2.bf16.msra.mxu0 0
        %1779 = vmatprep.subr.bf16.mxu0 0
        %1780 = vmatpush2.bf16.msra.mxu0 0
        %1781 = vmatprep.subr.bf16.mxu0 0
        %1782 = vmatpush2.bf16.msra.mxu0 0
        %1783 = vmatprep.subr.bf16.mxu0 0
        %1784 = vmatpush2.bf16.msra.mxu0 0
        %1785 = vmatprep.mubr.bf16.mxu0 0
        %1786 = vmatmul.mubr.bf16.gmra.mxu0 %v1628
        %v1787 = vpop.f32.mrf.mxu0
        %v1788 = vadd.f32 %v1625, %v1787
        %v1789 = vpop.f32.mrf.mxu0
        %v1790 = vadd.f32 %v1625, %v1789
        %v1791 = vpop.f32.mrf.mxu0
        %v1792 = vpop.f32.mrf.mxu0
        %1793 = vdwg.mxu0
        %v1802 = vcombine.low %v1665, %v1667
        %v1803 = vcombine.low %v1706, %v1708
        %v1804 = vcombine.low %v1747, %v1749
        %v1805 = vcombine.low %v1788, %v1790
        %1810 = vst [vmem:[%s326] sm:$0x77] %v1802
        %1811 = vst [vmem:[%s326 + $0x8] sm:$0x77] %v1803
        %1812 = vst [vmem:[%s326 + $0x10] sm:$0x77] %v1804
        %1813 = vst [vmem:[%s326 + $0x18] sm:$0x77] %v1805
        %s1814 = sand.u32 %s225, 1
        %s1815 = scalar_lea.sflag [#allocation3], %s1814
        %s1816 = sand.u32 %s225, 1
        %s1817 = smul.addr %s1816, 32
        %s1818 = scalar_lea.vmem [#allocation2], %s1817
        // Predicated region
        $region57: #{tpu_custom_call.1} parent=55 // pred_check
          %p1819 = pneg %p235
        $region58: #{tpu_custom_call.1} parent=55 // pred_check_branch
          %1821 = sbr.rel (%p1819) target = $region60
        $region59: #{tpu_custom_call.1} parent=55 // pred_region
          %s1822 = smul.u32 8, %s23
          %s1824 = ssub.s32 512, 512
          %1825 = vsyncadd %s1815, %s1824
          %s1826 = smul.addr %s1822, 64
          %s1827 = scalar_lea.hbm %s9, %s1826
          %s1829 = sshll.u32 %s1818, 4
          %s1830 = int_to_ptr.vmem [resolvable:$true] %s1829
          %1832 = dma.vmem_to_hbm [thread:$0]  %s1830, 512, %s1827, %s1815
        $region60: #{tpu_custom_call.1} parent=55 // pred_fallthru
          _
      $region56: #{tpu_custom_call.1} parent=5 // pred_fallthru
        _
      %p1833 = scmp.le.s32.totalorder 2, %s18
      // Predicated region
      $region61: #{tpu_custom_call.1} parent=5 // pred_check
        %p1834 = pneg %p1833
      $region62: #{tpu_custom_call.1} parent=5 // pred_check_branch
        %1836 = sbr.rel (%p1834) target = $region64
      $region63: #{tpu_custom_call.1} parent=5 // pred_region
        %s1837 = ssub.s32 %s18, 2
        // Predicated region
        $region65: #{tpu_custom_call.1} parent=63 // pred_check
          %p1838 = pneg %p241
        $region66: #{tpu_custom_call.1} parent=63 // pred_check_branch
          %1840 = sbr.rel (%p1838) target = $region68
        $region67: #{tpu_custom_call.1} parent=63 // pred_region
          %s1841 = sand.u32 %s226, 1
          %s1842 = scalar_lea.sflag [#allocation3], %s1841
          %s1843 = sand.u32 %s226, 1
          %s1844 = smul.addr %s1843, 32
          %s1845 = scalar_lea.vmem [#allocation2], %s1844
          %1846 = dma.done %s1842, 512
        $region68: #{tpu_custom_call.1} parent=63 // pred_fallthru
          _
      $region64: #{tpu_custom_call.1} parent=5 // pred_fallthru
        _
    $region6: #{tpu_custom_call.1} parent=1 // loop_footer
      %s22 = sadd.s32 1, %s18
    $region7: #{tpu_custom_call.1} parent=1 // loop_footer_branch
      %17 = sbr.rel target = $region3
    $region8: #{tpu_custom_call.1} parent=1 // loop_exit
      _
    %1847 = vsyncpa [#allocation3], 1
    %s1848 = scalar_lea.sflag [#allocation3], 1
    %1849 = vsyncpa %s1848, 1

</llo_original>
